<compile_context>
chip_gen: v7x
topology: tpu7x:2x2x1
jax: 0.10.0
libtpu: 0.0.40
codegen_flags: <defaults>
</compile_context>

<pallas_src>
import jax
import jax.numpy as jnp
from jax.experimental import pallas as pl
from jax.experimental.pallas import tpu as pltpu

NOISE_DIM = 100
CLASS_DIM = 4
H1 = 256
H2 = 512
OUTPUT_DIM = 1200
OUTPUT_DIM_PADDED = 1280   # next multiple of 128 -> lane-dense output stores
TB_MAX = 256               # batch tile, multiple of 256 (v6e/v7x MXU rows)


def _round_up(x, m):
    return (x + m - 1) // m * m


def _cgan_gen_kernel(z_ref, lbl_ref, w1z_ref, w1l_ref, b1_ref,
                     w2_ref, b2_ref, w3_ref, b3_ref, o_ref):
    # Layer 1: [z | labels] @ W1 + b1 as two dots (concat removed).
    # bf16 operands, f32 accumulation, f32 epilogue.
    h1 = jnp.dot(z_ref[...].astype(jnp.bfloat16), w1z_ref[...],
                 preferred_element_type=jnp.float32)
    h1 = h1 + jnp.dot(lbl_ref[...].astype(jnp.bfloat16), w1l_ref[...],
                      preferred_element_type=jnp.float32)
    h1 = jnp.maximum(h1 + b1_ref[...], 0.0)
    # Layer 2: Linear + ReLU
    h2 = jnp.dot(h1.astype(jnp.bfloat16), w2_ref[...],
                 preferred_element_type=jnp.float32)
    h2 = jnp.maximum(h2 + b2_ref[...], 0.0)
    # Layer 3: Linear + Tanh (output columns padded to 1280; pad cols are 0)
    h3 = jnp.dot(h2.astype(jnp.bfloat16), w3_ref[...],
                 preferred_element_type=jnp.float32)
    o_ref[...] = jnp.tanh(h3 + b3_ref[...]).astype(o_ref.dtype)


def cgan_generator_forward(z, labels, params):
    """z: (B, NOISE_DIM) f32, labels: (B, CLASS_DIM) f32 -> (B, OUTPUT_DIM) f32."""
    w1z, w1l, b1, w2, b2, w3, b3 = params
    B = z.shape[0]

    # Pad batch so it tiles cleanly (sublane multiple of 8, tile TB).
    tb = min(TB_MAX, _round_up(max(B, 1), 8))
    bp = _round_up(B, tb)
    if bp != B:
        z = jnp.pad(z, ((0, bp - B), (0, 0)))
        labels = jnp.pad(labels, ((0, bp - B), (0, 0)))
    grid = (bp // tb,)

    def batch_spec(f):
        return pl.BlockSpec((tb, f), lambda i: (i, 0))

    def resident_spec(arr):
        # Whole-array block, constant index_map -> pinned in VMEM across
        # all batch tiles (weights DMA'd once, not per grid step).
        return pl.BlockSpec(arr.shape, lambda i: (0, 0))

    flops = 2 * bp * (NOISE_DIM * H1 + CLASS_DIM * H1 +
                      H1 * H2 + H2 * OUTPUT_DIM_PADDED)
    bytes_accessed = int(
        z.size * 4 + labels.size * 4 +
        sum(int(a.size) * a.dtype.itemsize
            for a in (w1z, w1l, b1, w2, b2, w3, b3)) +
        bp * OUTPUT_DIM_PADDED * 4)

    out = pl.pallas_call(
        _cgan_gen_kernel,
        out_shape=jax.ShapeDtypeStruct((bp, OUTPUT_DIM_PADDED), jnp.float32),
        grid=grid,
        in_specs=[
            batch_spec(NOISE_DIM),            # z tile
            batch_spec(CLASS_DIM),            # labels tile
            resident_spec(w1z), resident_spec(w1l), resident_spec(b1),
            resident_spec(w2), resident_spec(b2),
            resident_spec(w3), resident_spec(b3),
        ],
        out_specs=pl.BlockSpec((tb, OUTPUT_DIM_PADDED), lambda i: (i, 0)),
        compiler_params=pltpu.CompilerParams(
            dimension_semantics=("parallel",),          # 2 TCs on v7x
            vmem_limit_bytes=32 * 1024 * 1024),
        cost_estimate=pl.CostEstimate(
            flops=int(flops),
            transcendentals=int(bp * OUTPUT_DIM_PADDED),
            bytes_accessed=bytes_accessed),
    )(z, labels, w1z, w1l, b1, w2, b2, w3, b3)

    return out[:B, :OUTPUT_DIM]


def init_params(key):
    """Master f32 params (PyTorch Linear default-ish scaling).

    Weights stored (in_features, out_features) -- transpose of torch."""
    dims = [(NOISE_DIM + CLASS_DIM, H1), (H1, H2), (H2, OUTPUT_DIM)]
    master = []
    for fan_in, fan_out in dims:
        key, kw, kb = jax.random.split(key, 3)
        bound = 1.0 / (fan_in ** 0.5)
        w = jax.random.uniform(kw, (fan_in, fan_out), jnp.float32,
                               minval=-bound, maxval=bound)
        b = jax.random.uniform(kb, (1, fan_out), jnp.float32,
                               minval=-bound, maxval=bound)
        master += [w, b]
    return tuple(master)


def pack_kernel_params(master):
    """Split W1, cast weights to bf16, zero-pad layer 3 to 1280 columns."""
    w1, b1, w2, b2, w3, b3 = master
    pad = OUTPUT_DIM_PADDED - OUTPUT_DIM
    w1z = w1[:NOISE_DIM].astype(jnp.bfloat16)           # (100, 256)
    w1l = w1[NOISE_DIM:].astype(jnp.bfloat16)           # (4, 256)
    w2b = w2.astype(jnp.bfloat16)                       # (256, 512)
    w3p = jnp.pad(w3, ((0, 0), (0, pad))).astype(jnp.bfloat16)  # (512, 1280)
    b3p = jnp.pad(b3, ((0, 0), (0, pad)))                        # (1, 1280)
    return (w1z, w1l, b1, w2b, b2, w3p, b3p)


def reference_forward(z, labels, master):
    """Pure-JAX reference with the same bf16 operand rounding, f32 accumulate."""
    w1, b1, w2, b2, w3, b3 = master
    r = lambda a: a.astype(jnp.bfloat16).astype(jnp.float32)
    x = jnp.concatenate([z, labels], axis=1)
    h = jnp.maximum(r(x) @ r(w1) + b1, 0.0)
    h = jnp.maximum(r(h) @ r(w2) + b2, 0.0)
    return jnp.tanh(r(h) @ r(w3) + b3)


if __name__ == "__main__":
    key = jax.random.PRNGKey(0)
    kp, kz, kl = jax.random.split(key, 3)

    B = 2
    master = init_params(kp)
    kparams = pack_kernel_params(master)
    z = jax.random.normal(kz, (B, NOISE_DIM), jnp.float32)
    labels = jax.nn.one_hot(
        jax.random.randint(kl, (B,), 0, CLASS_DIM), CLASS_DIM, dtype=jnp.float32)

    out = jax.block_until_ready(cgan_generator_forward(z, labels, kparams))
    ref = reference_forward(z, labels, master)

    assert out.shape == (B, OUTPUT_DIM), out.shape
    max_err = float(jnp.max(jnp.abs(out - ref)))
    assert max_err < 2e-2, max_err

    print("KERNEL_OK")
</pallas_src>

<mosaic_0001>
module attributes {stable_mosaic.version = 11 : i64} {
  func.func @_cgan_gen_kernel(%arg0: i32, %arg1: memref<8x100xf32, #tpu.memory_space<vmem>>, %arg2: memref<8x4xf32, #tpu.memory_space<vmem>>, %arg3: memref<100x256xbf16, #tpu.memory_space<vmem>>, %arg4: memref<4x256xbf16, #tpu.memory_space<vmem>>, %arg5: memref<1x256xf32, #tpu.memory_space<vmem>>, %arg6: memref<256x512xbf16, #tpu.memory_space<vmem>>, %arg7: memref<1x512xf32, #tpu.memory_space<vmem>>, %arg8: memref<512x1280xbf16, #tpu.memory_space<vmem>>, %arg9: memref<1x1280xf32, #tpu.memory_space<vmem>>, %arg10: memref<8x1280xf32, #tpu.memory_space<vmem>>) attributes {dimension_semantics = [#tpu.dimension_semantics<parallel>], iteration_bounds = array<i64: 1>, scalar_prefetch = 0 : i64, scratch_operands = 0 : i64, tpu.core_type = #tpu.core_type<tc>, window_params = [{transform_indices = @transform_0, window_bounds = array<i64: 8, 100>}, {transform_indices = @transform_1, window_bounds = array<i64: 8, 4>}, {pipeline_mode = #tpu.pipeline_mode<synchronous>, transform_indices = @transform_2, window_bounds = array<i64: 100, 256>}, {pipeline_mode = #tpu.pipeline_mode<synchronous>, transform_indices = @transform_3, window_bounds = array<i64: 4, 256>}, {pipeline_mode = #tpu.pipeline_mode<synchronous>, transform_indices = @transform_4, window_bounds = array<i64: 1, 256>}, {pipeline_mode = #tpu.pipeline_mode<synchronous>, transform_indices = @transform_5, window_bounds = array<i64: 256, 512>}, {pipeline_mode = #tpu.pipeline_mode<synchronous>, transform_indices = @transform_6, window_bounds = array<i64: 1, 512>}, {pipeline_mode = #tpu.pipeline_mode<synchronous>, transform_indices = @transform_7, window_bounds = array<i64: 512, 1280>}, {pipeline_mode = #tpu.pipeline_mode<synchronous>, transform_indices = @transform_8, window_bounds = array<i64: 1, 1280>}, {transform_indices = @transform_9, window_bounds = array<i64: 8, 1280>}]} {
    %c0 = arith.constant 0 : index
    %c0_0 = arith.constant 0 : index
    %0 = vector.load %arg1[%c0, %c0_0] : memref<8x100xf32, #tpu.memory_space<vmem>>, vector<8x100xf32>
    %1 = arith.truncf %0 : vector<8x100xf32> to vector<8x100xbf16>
    %c0_1 = arith.constant 0 : index
    %c0_2 = arith.constant 0 : index
    %2 = vector.load %arg3[%c0_1, %c0_2] : memref<100x256xbf16, #tpu.memory_space<vmem>>, vector<100x256xbf16>
    %cst = arith.constant dense<0.000000e+00> : vector<8x256xf32>
    %3 = tpu.matmul %1, %2, %cst {dimension_numbers = #tpu.dot_dimension_numbers<[1], [0], [0], [1], [0, 0, 1, 1], [], []>} : vector<8x100xbf16>, vector<100x256xbf16>, vector<8x256xf32> -> vector<8x256xf32>
    %c0_3 = arith.constant 0 : index
    %c0_4 = arith.constant 0 : index
    %4 = vector.load %arg2[%c0_3, %c0_4] : memref<8x4xf32, #tpu.memory_space<vmem>>, vector<8x4xf32>
    %5 = arith.truncf %4 : vector<8x4xf32> to vector<8x4xbf16>
    %c0_5 = arith.constant 0 : index
    %c0_6 = arith.constant 0 : index
    %6 = vector.load %arg4[%c0_5, %c0_6] : memref<4x256xbf16, #tpu.memory_space<vmem>>, vector<4x256xbf16>
    %cst_7 = arith.constant dense<0.000000e+00> : vector<8x256xf32>
    %7 = tpu.matmul %5, %6, %cst_7 {dimension_numbers = #tpu.dot_dimension_numbers<[1], [0], [0], [1], [0, 0, 1, 1], [], []>} : vector<8x4xbf16>, vector<4x256xbf16>, vector<8x256xf32> -> vector<8x256xf32>
    %8 = arith.addf %3, %7 : vector<8x256xf32>
    %c0_8 = arith.constant 0 : index
    %c0_9 = arith.constant 0 : index
    %9 = vector.load %arg5[%c0_8, %c0_9] : memref<1x256xf32, #tpu.memory_space<vmem>>, vector<1x256xf32>
    %10 = vector.broadcast %9 : vector<1x256xf32> to vector<8x256xf32>
    %11 = arith.addf %8, %10 : vector<8x256xf32>
    %cst_10 = arith.constant 0.000000e+00 : f32
    %12 = vector.broadcast %cst_10 : f32 to vector<8x256xf32>
    %13 = arith.maximumf %11, %12 : vector<8x256xf32>
    %14 = arith.truncf %13 : vector<8x256xf32> to vector<8x256xbf16>
    %c0_11 = arith.constant 0 : index
    %c0_12 = arith.constant 0 : index
    %15 = vector.load %arg6[%c0_11, %c0_12] : memref<256x512xbf16, #tpu.memory_space<vmem>>, vector<256x512xbf16>
    %cst_13 = arith.constant dense<0.000000e+00> : vector<8x512xf32>
    %16 = tpu.matmul %14, %15, %cst_13 {dimension_numbers = #tpu.dot_dimension_numbers<[1], [0], [0], [1], [0, 0, 1, 1], [], []>} : vector<8x256xbf16>, vector<256x512xbf16>, vector<8x512xf32> -> vector<8x512xf32>
    %c0_14 = arith.constant 0 : index
    %c0_15 = arith.constant 0 : index
    %17 = vector.load %arg7[%c0_14, %c0_15] : memref<1x512xf32, #tpu.memory_space<vmem>>, vector<1x512xf32>
    %18 = vector.broadcast %17 : vector<1x512xf32> to vector<8x512xf32>
    %19 = arith.addf %16, %18 : vector<8x512xf32>
    %cst_16 = arith.constant 0.000000e+00 : f32
    %20 = vector.broadcast %cst_16 : f32 to vector<8x512xf32>
    %21 = arith.maximumf %19, %20 : vector<8x512xf32>
    %22 = arith.truncf %21 : vector<8x512xf32> to vector<8x512xbf16>
    %c0_17 = arith.constant 0 : index
    %c0_18 = arith.constant 0 : index
    %23 = vector.load %arg8[%c0_17, %c0_18] : memref<512x1280xbf16, #tpu.memory_space<vmem>>, vector<512x1280xbf16>
    %cst_19 = arith.constant dense<0.000000e+00> : vector<8x1280xf32>
    %24 = tpu.matmul %22, %23, %cst_19 {dimension_numbers = #tpu.dot_dimension_numbers<[1], [0], [0], [1], [0, 0, 1, 1], [], []>} : vector<8x512xbf16>, vector<512x1280xbf16>, vector<8x1280xf32> -> vector<8x1280xf32>
    %c0_20 = arith.constant 0 : index
    %c0_21 = arith.constant 0 : index
    %25 = vector.load %arg9[%c0_20, %c0_21] : memref<1x1280xf32, #tpu.memory_space<vmem>>, vector<1x1280xf32>
    %26 = vector.broadcast %25 : vector<1x1280xf32> to vector<8x1280xf32>
    %27 = arith.addf %24, %26 : vector<8x1280xf32>
    %28 = math.tanh %27 : vector<8x1280xf32>
    %c0_22 = arith.constant 0 : index
    %c0_23 = arith.constant 0 : index
    %29 = vector.load %arg10[%c0_22, %c0_23] : memref<8x1280xf32, #tpu.memory_space<vmem>>, vector<8x1280xf32>
    tpu.vector_store %arg10[%c0_22, %c0_23], %28 {strides = array<i32>} : memref<8x1280xf32, #tpu.memory_space<vmem>>, vector<8x1280xf32>,
    return
  }
  func.func @transform_0(%arg0: i32) -> (i32, i32) {
    %c0_i32 = arith.constant 0 : i32
    %c0_i32_0 = arith.constant 0 : i32
    return %arg0, %c0_i32 : i32, i32
  }
  func.func @transform_1(%arg0: i32) -> (i32, i32) {
    %c0_i32 = arith.constant 0 : i32
    %c0_i32_0 = arith.constant 0 : i32
    return %arg0, %c0_i32 : i32, i32
  }
  func.func @transform_2(%arg0: i32) -> (i32, i32) {
    %c0_i32 = arith.constant 0 : i32
    %c0_i32_0 = arith.constant 0 : i32
    %c0_i32_1 = arith.constant 0 : i32
    return %c0_i32, %c0_i32_0 : i32, i32
  }
  func.func @transform_3(%arg0: i32) -> (i32, i32) {
    %c0_i32 = arith.constant 0 : i32
    %c0_i32_0 = arith.constant 0 : i32
    %c0_i32_1 = arith.constant 0 : i32
    return %c0_i32, %c0_i32_0 : i32, i32
  }
  func.func @transform_4(%arg0: i32) -> (i32, i32) {
    %c0_i32 = arith.constant 0 : i32
    %c0_i32_0 = arith.constant 0 : i32
    %c0_i32_1 = arith.constant 0 : i32
    return %c0_i32, %c0_i32_0 : i32, i32
  }
  func.func @transform_5(%arg0: i32) -> (i32, i32) {
    %c0_i32 = arith.constant 0 : i32
    %c0_i32_0 = arith.constant 0 : i32
    %c0_i32_1 = arith.constant 0 : i32
    return %c0_i32, %c0_i32_0 : i32, i32
  }
  func.func @transform_6(%arg0: i32) -> (i32, i32) {
    %c0_i32 = arith.constant 0 : i32
    %c0_i32_0 = arith.constant 0 : i32
    %c0_i32_1 = arith.constant 0 : i32
    return %c0_i32, %c0_i32_0 : i32, i32
  }
  func.func @transform_7(%arg0: i32) -> (i32, i32) {
    %c0_i32 = arith.constant 0 : i32
    %c0_i32_0 = arith.constant 0 : i32
    %c0_i32_1 = arith.constant 0 : i32
    return %c0_i32, %c0_i32_0 : i32, i32
  }
  func.func @transform_8(%arg0: i32) -> (i32, i32) {
    %c0_i32 = arith.constant 0 : i32
    %c0_i32_0 = arith.constant 0 : i32
    %c0_i32_1 = arith.constant 0 : i32
    return %c0_i32, %c0_i32_0 : i32, i32
  }
  func.func @transform_9(%arg0: i32) -> (i32, i32) {
    %c0_i32 = arith.constant 0 : i32
    %c0_i32_0 = arith.constant 0 : i32
    return %arg0, %c0_i32 : i32, i32
  }
}

</mosaic_0001>

<llo_original>
// kernel: tpu_custom_call.1
$region0: #{tpu_custom_call.1}
  #allocation0 [shape = 'u32[]', space=smem, size = 0x4, offset = 0x4, fixed_abs, tag = 'smem constant byte address 0x4 - core index']
  #allocation1 [shape = 'u32[144,128]{1,0:T(1,128)}', space=vmem, size = 0x12000, scoped, tag = 'internal scratch']
  %s0 = inlined_call_operand.hbm [shape: f32[8,100], index: 0, kind: input, shape index: {}]
  %s1 = inlined_call_operand.vmem [shape: f32[8,4], index: 1, kind: input, shape index: {}]
  %s2 = inlined_call_operand.hbm [shape: bf16[100,256], index: 2, kind: input, shape index: {}]
  %s3 = inlined_call_operand.hbm [shape: bf16[4,256], index: 3, kind: input, shape index: {}]
  %s4 = inlined_call_operand.hbm [shape: f32[1,256], index: 4, kind: input, shape index: {}]
  %s5 = inlined_call_operand.hbm [shape: bf16[256,512], index: 5, kind: input, shape index: {}]
  %s6 = inlined_call_operand.hbm [shape: f32[1,512], index: 6, kind: input, shape index: {}]
  %s7 = inlined_call_operand.hbm [shape: bf16[512,1280], index: 7, kind: input, shape index: {}]
  %s8 = inlined_call_operand.hbm [shape: f32[1,1280], index: 8, kind: input, shape index: {}]
  %s9 = inlined_call_operand.hbm [shape: f32[8,1280], index: 9, kind: output, shape index: {}]
  %s10 = sld [smem:[#allocation0]]
  $region78: #{tpu_custom_call.1} parent=0
    _
  %s12 = ssub.s32 1, %s10
  %s13 = scalar_select 0, %s12, %s10
  $region1: #{tpu_custom_call.1} parent=0
    #allocation2 [shape = 'u8[4096]{0}', space=vmem, size = 0x1000, scoped, tag = 'input window, operand 0, single buffered']
    #allocation3 [shape = 's32[1]{0}', space=sflag, size = 0x4, scoped, tag = 'scoped memory for tpu_custom_call.1']
    #allocation4 [shape = 's32[1]{0}', space=sflag, size = 0x4, scoped, tag = 'scoped memory for tpu_custom_call.1']
    #allocation5 [shape = 'u8[53248]{0}', space=vmem, size = 0xd000, scoped, tag = 'input window, operand 2, single buffered']
    #allocation6 [shape = 's32[1]{0}', space=sflag, size = 0x4, scoped, tag = 'scoped memory for tpu_custom_call.1']
    #allocation7 [shape = 'u8[2048]{0}', space=vmem, size = 0x800, scoped, tag = 'input window, operand 3, single buffered']
    #allocation8 [shape = 'u8[1024]{0}', space=vmem, size = 0x400, scoped, tag = 'input window, operand 4, single buffered']
    #allocation9 [shape = 's32[1]{0}', space=sflag, size = 0x4, scoped, tag = 'scoped memory for tpu_custom_call.1']
    #allocation10 [shape = 'u8[262144]{0}', space=vmem, size = 0x40000, scoped, tag = 'input window, operand 5, single buffered']
    #allocation11 [shape = 'u8[2048]{0}', space=vmem, size = 0x800, scoped, tag = 'input window, operand 6, single buffered']
    #allocation12 [shape = 's32[1]{0}', space=sflag, size = 0x4, scoped, tag = 'scoped memory for tpu_custom_call.1']
    #allocation13 [shape = 'u8[1310720]{0}', space=vmem, size = 0x140000, scoped, tag = 'input window, operand 7, single buffered']
    #allocation14 [shape = 'u8[5120]{0}', space=vmem, size = 0x1400, scoped, tag = 'input window, operand 8, single buffered']
    #allocation15 [shape = 's32[1]{0}', space=sflag, size = 0x4, scoped, tag = 'scoped memory for tpu_custom_call.1']
    #allocation16 [shape = 'u8[40960]{0}', space=vmem, size = 0xa000, scoped, tag = 'output window, operand 0, single buffered']
    %14 = vsyncpa [#allocation3], 0
    %15 = vsyncpa [#allocation6], 0
    %16 = vsyncpa [#allocation9], 0
    %17 = vsyncpa [#allocation12], 0
    %18 = vsyncpa [#allocation15], 0
    %19 = vsyncpa [#allocation4], 0
    // Predicated region
    $region2: #{tpu_custom_call.1} parent=1 // pred_check
      _
    $region3: #{tpu_custom_call.1} parent=1 // pred_check_branch
      %21 = sbr.rel (0) target = $region5
    $region4: #{tpu_custom_call.1} parent=1 // pred_region
      %s23 = ssub.s32 128, 128
      %24 = vsyncadd [#allocation3], %s23
      %s26 = sshll.u32 [#allocation2], 4
      %s27 = int_to_ptr.vmem [resolvable:$true] %s26
      %29 = dma.hbm_to_vmem [thread:$0]  %s0, 128, %s27, [#allocation3]
    $region5: #{tpu_custom_call.1} parent=1 // pred_fallthru
      _
    // Predicated region
    $region6: #{tpu_custom_call.1} parent=1 // pred_check
      _
    $region7: #{tpu_custom_call.1} parent=1 // pred_check_branch
      %31 = sbr.rel (0) target = $region9
    $region8: #{tpu_custom_call.1} parent=1 // pred_region
      _
    $region9: #{tpu_custom_call.1} parent=1 // pred_fallthru
      _
    // Predicated region
    $region10: #{tpu_custom_call.1} parent=1 // pred_check
      _
    $region11: #{tpu_custom_call.1} parent=1 // pred_check_branch
      %33 = sbr.rel (0) target = $region13
    $region12: #{tpu_custom_call.1} parent=1 // pred_region
      %s35 = ssub.s32 1664, 1664
      %36 = vsyncadd [#allocation6], %s35
      %s37 = sshll.u32 [#allocation5], 4
      %s38 = int_to_ptr.vmem [resolvable:$true] %s37
      %43 = dma.hbm_to_vmem [thread:$0]  %s2, 1664, %s38, [#allocation6], 128, 128, 8
    $region13: #{tpu_custom_call.1} parent=1 // pred_fallthru
      _
    // Predicated region
    $region14: #{tpu_custom_call.1} parent=1 // pred_check
      _
    $region15: #{tpu_custom_call.1} parent=1 // pred_check_branch
      %45 = sbr.rel (0) target = $region17
    $region16: #{tpu_custom_call.1} parent=1 // pred_region
      %s47 = ssub.s32 64, 64
      %48 = vsyncadd [#allocation6], %s47
      %s50 = sshll.u32 [#allocation7], 4
      %s51 = int_to_ptr.vmem [resolvable:$true] %s50
      %53 = dma.hbm_to_vmem [thread:$0]  %s3, 64, %s51, [#allocation6]
    $region17: #{tpu_custom_call.1} parent=1 // pred_fallthru
      _
    // Predicated region
    $region18: #{tpu_custom_call.1} parent=1 // pred_check
      _
    $region19: #{tpu_custom_call.1} parent=1 // pred_check_branch
      %55 = sbr.rel (0) target = $region21
    $region20: #{tpu_custom_call.1} parent=1 // pred_region
      %s57 = ssub.s32 32, 32
      %58 = vsyncadd [#allocation9], %s57
      %s60 = sshll.u32 [#allocation8], 4
      %s61 = int_to_ptr.vmem [resolvable:$true] %s60
      %63 = dma.hbm_to_vmem [thread:$0]  %s4, 32, %s61, [#allocation9]
    $region21: #{tpu_custom_call.1} parent=1 // pred_fallthru
      _
    // Predicated region
    $region22: #{tpu_custom_call.1} parent=1 // pred_check
      _
    $region23: #{tpu_custom_call.1} parent=1 // pred_check_branch
      %65 = sbr.rel (0) target = $region25
    $region24: #{tpu_custom_call.1} parent=1 // pred_region
      %s67 = ssub.s32 8192, 8192
      %68 = vsyncadd [#allocation9], %s67
      %s69 = sshll.u32 [#allocation10], 4
      %s70 = int_to_ptr.vmem [resolvable:$true] %s69
      %75 = dma.hbm_to_vmem [thread:$0]  %s5, 8192, %s70, [#allocation9], 256, 256, 16
    $region25: #{tpu_custom_call.1} parent=1 // pred_fallthru
      _
    // Predicated region
    $region26: #{tpu_custom_call.1} parent=1 // pred_check
      _
    $region27: #{tpu_custom_call.1} parent=1 // pred_check_branch
      %77 = sbr.rel (0) target = $region29
    $region28: #{tpu_custom_call.1} parent=1 // pred_region
      %s79 = ssub.s32 64, 64
      %80 = vsyncadd [#allocation12], %s79
      %s82 = sshll.u32 [#allocation11], 4
      %s83 = int_to_ptr.vmem [resolvable:$true] %s82
      %85 = dma.hbm_to_vmem [thread:$0]  %s6, 64, %s83, [#allocation12]
    $region29: #{tpu_custom_call.1} parent=1 // pred_fallthru
      _
    // Predicated region
    $region30: #{tpu_custom_call.1} parent=1 // pred_check
      _
    $region31: #{tpu_custom_call.1} parent=1 // pred_check_branch
      %87 = sbr.rel (0) target = $region33
    $region32: #{tpu_custom_call.1} parent=1 // pred_region
      %s89 = ssub.s32 40960, 40960
      %90 = vsyncadd [#allocation12], %s89
      %s91 = sshll.u32 [#allocation13], 4
      %s92 = int_to_ptr.vmem [resolvable:$true] %s91
      %97 = dma.hbm_to_vmem [thread:$0]  %s7, 40960, %s92, [#allocation12], 640, 640, 40
    $region33: #{tpu_custom_call.1} parent=1 // pred_fallthru
      _
    // Predicated region
    $region34: #{tpu_custom_call.1} parent=1 // pred_check
      _
    $region35: #{tpu_custom_call.1} parent=1 // pred_check_branch
      %99 = sbr.rel (0) target = $region37
    $region36: #{tpu_custom_call.1} parent=1 // pred_region
      %s101 = ssub.s32 160, 160
      %102 = vsyncadd [#allocation15], %s101
      %s104 = sshll.u32 [#allocation14], 4
      %s105 = int_to_ptr.vmem [resolvable:$true] %s104
      %107 = dma.hbm_to_vmem [thread:$0]  %s8, 160, %s105, [#allocation15]
    $region37: #{tpu_custom_call.1} parent=1 // pred_fallthru
      _
    // Predicated region
    $region38: #{tpu_custom_call.1} parent=1 // pred_check
      _
    $region39: #{tpu_custom_call.1} parent=1 // pred_check_branch
      %109 = sbr.rel (0) target = $region41
    $region40: #{tpu_custom_call.1} parent=1 // pred_region
      %110 = dma.done [#allocation3], 128
    $region41: #{tpu_custom_call.1} parent=1 // pred_fallthru
      _
    // Predicated region
    $region42: #{tpu_custom_call.1} parent=1 // pred_check
      _
    $region43: #{tpu_custom_call.1} parent=1 // pred_check_branch
      %112 = sbr.rel (0) target = $region45
    $region44: #{tpu_custom_call.1} parent=1 // pred_region
      %113 = dma.done [#allocation6], 1664
    $region45: #{tpu_custom_call.1} parent=1 // pred_fallthru
      _
    // Predicated region
    $region46: #{tpu_custom_call.1} parent=1 // pred_check
      _
    $region47: #{tpu_custom_call.1} parent=1 // pred_check_branch
      %115 = sbr.rel (0) target = $region49
    $region48: #{tpu_custom_call.1} parent=1 // pred_region
      %116 = dma.done [#allocation6], 64
    $region49: #{tpu_custom_call.1} parent=1 // pred_fallthru
      _
    // Predicated region
    $region50: #{tpu_custom_call.1} parent=1 // pred_check
      _
    $region51: #{tpu_custom_call.1} parent=1 // pred_check_branch
      %118 = sbr.rel (0) target = $region53
    $region52: #{tpu_custom_call.1} parent=1 // pred_region
      %119 = dma.done [#allocation9], 32
    $region53: #{tpu_custom_call.1} parent=1 // pred_fallthru
      _
    // Predicated region
    $region54: #{tpu_custom_call.1} parent=1 // pred_check
      _
    $region55: #{tpu_custom_call.1} parent=1 // pred_check_branch
      %121 = sbr.rel (0) target = $region57
    $region56: #{tpu_custom_call.1} parent=1 // pred_region
      %122 = dma.done [#allocation9], 8192
    $region57: #{tpu_custom_call.1} parent=1 // pred_fallthru
      _
    // Predicated region
    $region58: #{tpu_custom_call.1} parent=1 // pred_check
      _
    $region59: #{tpu_custom_call.1} parent=1 // pred_check_branch
      %124 = sbr.rel (0) target = $region61
    $region60: #{tpu_custom_call.1} parent=1 // pred_region
      %125 = dma.done [#allocation12], 64
    $region61: #{tpu_custom_call.1} parent=1 // pred_fallthru
      _
    // Predicated region
    $region62: #{tpu_custom_call.1} parent=1 // pred_check
      _
    $region63: #{tpu_custom_call.1} parent=1 // pred_check_branch
      %127 = sbr.rel (0) target = $region65
    $region64: #{tpu_custom_call.1} parent=1 // pred_region
      %128 = dma.done [#allocation12], 40960
    $region65: #{tpu_custom_call.1} parent=1 // pred_fallthru
      _
    // Predicated region
    $region66: #{tpu_custom_call.1} parent=1 // pred_check
      _
    $region67: #{tpu_custom_call.1} parent=1 // pred_check_branch
      %130 = sbr.rel (0) target = $region69
    $region68: #{tpu_custom_call.1} parent=1 // pred_region
      %131 = dma.done [#allocation15], 160
    $region69: #{tpu_custom_call.1} parent=1 // pred_fallthru
      _
    %v133 = vld [vmem:[#allocation2] sm:$0xff]
    %v134 = vpack.c.bf16 %v133, %v133
    %v135 = vld [vmem:[#allocation5] sm:$0xff]
    %v136 = vld [vmem:[#allocation5 + $0x8] sm:$0xff]
    %v137 = vld [vmem:[#allocation5 + $0x10] sm:$0xff]
    %v138 = vld [vmem:[#allocation5 + $0x18] sm:$0xff]
    %v139 = vld [vmem:[#allocation5 + $0x20] sm:$0xff]
    %v140 = vld [vmem:[#allocation5 + $0x28] sm:$0xff]
    %v141 = vld [vmem:[#allocation5 + $0x30] sm:$0xff]
    %v142 = vld [vmem:[#allocation5 + $0x38] sm:$0xff]
    %v143 = vld [vmem:[#allocation5 + $0x40] sm:$0xff]
    %v144 = vld [vmem:[#allocation5 + $0x48] sm:$0xff]
    %v145 = vld [vmem:[#allocation5 + $0x50] sm:$0xff]
    %v146 = vld [vmem:[#allocation5 + $0x58] sm:$0xff]
    %v147 = vld [vmem:[#allocation5 + $0x60] sm:$0x33]
    %v148 = vld [vmem:[%s1] sm:$0xff]
    %v149 = vpack.c.bf16 %v148, %v148
    %v150 = vld [vmem:[#allocation7] sm:$0xf]
    %v153 = vunpack.c.l.s4 1983009808
    %v154 = vunpack.c.0.s8 %v153
    %v155 = vlaneseq
    %v156 = vshrl.u32 %v155, 7
    %v157 = vsub.s32 %v154, %v156
    %v158 = vrot.slane %v150, %v157
    %v159 = vcombine.high %v158, %v158
    %vm160 = vcmask 31744
    %v162 = vsel %vm160, %v149, 0
    %vm164 = vcmask 1041408
    %v166 = vsel %vm164, %v158, 0
    %v169 = vsel %vm164, %v159, 0
    %171 = vmatprep.subr.bf16.mxu0 %v169
    %172 = vmatpush1.bf16.msra.mxu0 %v166
    %173 = vmatprep.subr.bf16.mxu0 0
    %174 = vmatpush1.bf16.msra.mxu0 0
    %175 = vmatprep.subr.bf16.mxu0 0
    %176 = vmatpush1.bf16.msra.mxu0 0
    %177 = vmatprep.subr.bf16.mxu0 0
    %178 = vmatpush1.bf16.msra.mxu0 0
    %179 = vmatprep.subr.bf16.mxu0 0
    %180 = vmatpush1.bf16.msra.mxu0 0
    %181 = vmatprep.subr.bf16.mxu0 0
    %182 = vmatpush1.bf16.msra.mxu0 0
    %183 = vmatprep.subr.bf16.mxu0 0
    %184 = vmatpush1.bf16.msra.mxu0 0
    %185 = vmatprep.subr.bf16.mxu0 0
    %186 = vmatpush1.bf16.msra.mxu0 0
    %187 = vmatprep.subr.bf16.mxu0 0
    %188 = vmatpush1.bf16.msra.mxu0 0
    %189 = vmatprep.subr.bf16.mxu0 0
    %190 = vmatpush1.bf16.msra.mxu0 0
    %191 = vmatprep.subr.bf16.mxu0 0
    %192 = vmatpush1.bf16.msra.mxu0 0
    %193 = vmatprep.subr.bf16.mxu0 0
    %194 = vmatpush1.bf16.msra.mxu0 0
    %195 = vmatprep.subr.bf16.mxu0 0
    %196 = vmatpush1.bf16.msra.mxu0 0
    %197 = vmatprep.subr.bf16.mxu0 0
    %198 = vmatpush1.bf16.msra.mxu0 0
    %199 = vmatprep.subr.bf16.mxu0 0
    %200 = vmatpush1.bf16.msra.mxu0 0
    %201 = vmatprep.subr.bf16.mxu0 0
    %202 = vmatpush1.bf16.msra.mxu0 0
    %203 = vmatprep.mubr.bf16.mxu0 0
    %204 = vmatmul.mubr.bf16.gmra.mrb[0].mxu0 %v162
    %v205 = vpop.f32.mrb[0].mxu0
    %v206 = vadd.f32 0.0, %v205
    %v207 = vpop.f32.mrb[0].mxu0
    %v208 = vadd.f32 0.0, %v207
    %v209 = vpop.f32.mrb[0].mxu0
    %v210 = vpop.f32.mrb[0].mxu0
    %211 = vdwg.mxu0
    %v225 = vunpack.c.l.b16 %v135
    %v226 = vunpack.c.h.b16 %v135
    %v227 = vunpack.c.l.b16 %v136
    %v228 = vunpack.c.h.b16 %v136
    %v229 = vunpack.c.l.b16 %v137
    %v230 = vunpack.c.h.b16 %v137
    %v231 = vunpack.c.l.b16 %v138
    %v232 = vunpack.c.h.b16 %v138
    %v233 = vunpack.c.l.b16 %v139
    %v234 = vunpack.c.h.b16 %v139
    %v235 = vunpack.c.l.b16 %v140
    %v236 = vunpack.c.h.b16 %v140
    %v237 = vunpack.c.l.b16 %v141
    %v238 = vunpack.c.h.b16 %v141
    %v239 = vunpack.c.l.b16 %v142
    %v240 = vunpack.c.h.b16 %v142
    %v241 = vunpack.c.l.b16 %v143
    %v242 = vunpack.c.h.b16 %v143
    %v243 = vunpack.c.l.b16 %v144
    %v244 = vunpack.c.h.b16 %v144
    %v245 = vunpack.c.l.b16 %v145
    %v246 = vunpack.c.h.b16 %v145
    %v247 = vunpack.c.l.b16 %v146
    %v248 = vunpack.c.h.b16 %v146
    %v249 = vunpack.c.l.b16 %v147
    %v250 = vunpack.c.h.b16 %v147
    %v251 = vpack.c.b16 %v227, %v225
    %v252 = vpack.c.b16 %v228, %v226
    %v253 = vpack.c.b16 %v231, %v229
    %v254 = vpack.c.b16 %v232, %v230
    %v255 = vpack.c.b16 %v235, %v233
    %v256 = vpack.c.b16 %v236, %v234
    %v257 = vpack.c.b16 %v239, %v237
    %v258 = vpack.c.b16 %v240, %v238
    %v259 = vpack.c.b16 %v243, %v241
    %v260 = vpack.c.b16 %v244, %v242
    %v261 = vpack.c.b16 %v247, %v245
    %v262 = vpack.c.b16 %v248, %v246
    %v263 = vpack.c.b16 %v249, %v249
    %v264 = vpack.c.b16 %v250, %v250
    %vm277 = vcmask 818176
    %v279 = vsel %vm277, %v134, 0
    %v282 = vsel %vm164, %v263, 0
    %v285 = vsel %vm164, %v264, 0
    %287 = vmatprep.subr.bf16.mxu0 %v252
    %288 = vmatpush1.bf16.msra.mxu0 %v251
    %289 = vmatprep.subr.bf16.mxu0 %v254
    %290 = vmatpush1.bf16.msra.mxu0 %v253
    %291 = vmatprep.subr.bf16.mxu0 %v256
    %292 = vmatpush1.bf16.msra.mxu0 %v255
    %293 = vmatprep.subr.bf16.mxu0 %v258
    %294 = vmatpush1.bf16.msra.mxu0 %v257
    %295 = vmatprep.subr.bf16.mxu0 %v260
    %296 = vmatpush1.bf16.msra.mxu0 %v259
    %297 = vmatprep.subr.bf16.mxu0 %v262
    %298 = vmatpush1.bf16.msra.mxu0 %v261
    %299 = vmatprep.subr.bf16.mxu0 %v285
    %300 = vmatpush1.bf16.msra.mxu0 %v282
    %301 = vmatprep.subr.bf16.mxu0 0
    %302 = vmatpush1.bf16.msra.mxu0 0
    %303 = vmatprep.subr.bf16.mxu0 0
    %304 = vmatpush1.bf16.msra.mxu0 0
    %305 = vmatprep.subr.bf16.mxu0 0
    %306 = vmatpush1.bf16.msra.mxu0 0
    %307 = vmatprep.subr.bf16.mxu0 0
    %308 = vmatpush1.bf16.msra.mxu0 0
    %309 = vmatprep.subr.bf16.mxu0 0
    %310 = vmatpush1.bf16.msra.mxu0 0
    %311 = vmatprep.subr.bf16.mxu0 0
    %312 = vmatpush1.bf16.msra.mxu0 0
    %313 = vmatprep.subr.bf16.mxu0 0
    %314 = vmatpush1.bf16.msra.mxu0 0
    %315 = vmatprep.subr.bf16.mxu0 0
    %316 = vmatpush1.bf16.msra.mxu0 0
    %317 = vmatprep.subr.bf16.mxu0 0
    %318 = vmatpush1.bf16.msra.mxu0 0
    %319 = vmatprep.mubr.bf16.mxu0 0
    %320 = vmatmul.mubr.bf16.gmra.mrb[0].mxu0 %v279
    %v321 = vpop.f32.mrb[0].mxu0
    %v322 = vadd.f32 %v206, %v321
    %v323 = vpop.f32.mrb[0].mxu0
    %v324 = vadd.f32 %v208, %v323
    %v325 = vpop.f32.mrb[0].mxu0
    %v326 = vpop.f32.mrb[0].mxu0
    %327 = vdwg.mxu0
    %v328 = vld [vmem:[#allocation8] sm:$0x3]
    %v330 = vlaneseq
    %v331 = vshrl.u32 %v330, 7
    %v332 = vsub.s32 0, %v331
    %v333 = vrot.slane %v328, %v332
    %v334 = vlaneseq
    %v335 = vshrl.u32 %v334, 7
    %v336 = vsub.s32 1, %v335
    %v337 = vrot.slane %v328, %v336
    %v340 = vadd.f32 %v322, %v333
    %v341 = vadd.f32 %v324, %v337
    %v342 = vmax.f32 %v340, 0.0
    %v343 = vmax.f32 %v341, 0.0
    %v344 = vpack.c.bf16 %v342, %v342
    %v345 = vpack.c.bf16 %v343, %v343
    %v346 = vld [vmem:[#allocation10] sm:$0xff]
    %v347 = vld [vmem:[#allocation10 + $0x8] sm:$0xff]
    %v348 = vld [vmem:[#allocation10 + $0x10] sm:$0xff]
    %v349 = vld [vmem:[#allocation10 + $0x18] sm:$0xff]
    %v350 = vld [vmem:[#allocation10 + $0x20] sm:$0xff]
    %v351 = vld [vmem:[#allocation10 + $0x28] sm:$0xff]
    %v352 = vld [vmem:[#allocation10 + $0x30] sm:$0xff]
    %v353 = vld [vmem:[#allocation10 + $0x38] sm:$0xff]
    %v354 = vld [vmem:[#allocation10 + $0x40] sm:$0xff]
    %v355 = vld [vmem:[#allocation10 + $0x48] sm:$0xff]
    %v356 = vld [vmem:[#allocation10 + $0x50] sm:$0xff]
    %v357 = vld [vmem:[#allocation10 + $0x58] sm:$0xff]
    %v358 = vld [vmem:[#allocation10 + $0x60] sm:$0xff]
    %v359 = vld [vmem:[#allocation10 + $0x68] sm:$0xff]
    %v360 = vld [vmem:[#allocation10 + $0x70] sm:$0xff]
    %v361 = vld [vmem:[#allocation10 + $0x78] sm:$0xff]
    %v362 = vld [vmem:[#allocation10 + $0x80] sm:$0xff]
    %v363 = vld [vmem:[#allocation10 + $0x88] sm:$0xff]
    %v364 = vld [vmem:[#allocation10 + $0x90] sm:$0xff]
    %v365 = vld [vmem:[#allocation10 + $0x98] sm:$0xff]
    %v366 = vld [vmem:[#allocation10 + $0xa0] sm:$0xff]
    %v367 = vld [vmem:[#allocation10 + $0xa8] sm:$0xff]
    %v368 = vld [vmem:[#allocation10 + $0xb0] sm:$0xff]
    %v369 = vld [vmem:[#allocation10 + $0xb8] sm:$0xff]
    %v370 = vld [vmem:[#allocation10 + $0xc0] sm:$0xff]
    %v371 = vld [vmem:[#allocation10 + $0xc8] sm:$0xff]
    %v372 = vld [vmem:[#allocation10 + $0xd0] sm:$0xff]
    %v373 = vld [vmem:[#allocation10 + $0xd8] sm:$0xff]
    %v374 = vld [vmem:[#allocation10 + $0xe0] sm:$0xff]
    %v375 = vld [vmem:[#allocation10 + $0xe8] sm:$0xff]
    %v376 = vld [vmem:[#allocation10 + $0xf0] sm:$0xff]
    %v377 = vld [vmem:[#allocation10 + $0xf8] sm:$0xff]
    %v378 = vld [vmem:[#allocation10 + $0x100] sm:$0xff]
    %v379 = vld [vmem:[#allocation10 + $0x108] sm:$0xff]
    %v380 = vld [vmem:[#allocation10 + $0x110] sm:$0xff]
    %v381 = vld [vmem:[#allocation10 + $0x118] sm:$0xff]
    %v382 = vld [vmem:[#allocation10 + $0x120] sm:$0xff]
    %v383 = vld [vmem:[#allocation10 + $0x128] sm:$0xff]
    %v384 = vld [vmem:[#allocation10 + $0x130] sm:$0xff]
    %v385 = vld [vmem:[#allocation10 + $0x138] sm:$0xff]
    %v386 = vld [vmem:[#allocation10 + $0x140] sm:$0xff]
    %v387 = vld [vmem:[#allocation10 + $0x148] sm:$0xff]
    %v388 = vld [vmem:[#allocation10 + $0x150] sm:$0xff]
    %v389 = vld [vmem:[#allocation10 + $0x158] sm:$0xff]
    %v390 = vld [vmem:[#allocation10 + $0x160] sm:$0xff]
    %v391 = vld [vmem:[#allocation10 + $0x168] sm:$0xff]
    %v392 = vld [vmem:[#allocation10 + $0x170] sm:$0xff]
    %v393 = vld [vmem:[#allocation10 + $0x178] sm:$0xff]
    %v394 = vld [vmem:[#allocation10 + $0x180] sm:$0xff]
    %v395 = vld [vmem:[#allocation10 + $0x188] sm:$0xff]
    %v396 = vld [vmem:[#allocation10 + $0x190] sm:$0xff]
    %v397 = vld [vmem:[#allocation10 + $0x198] sm:$0xff]
    %v398 = vld [vmem:[#allocation10 + $0x1a0] sm:$0xff]
    %v399 = vld [vmem:[#allocation10 + $0x1a8] sm:$0xff]
    %v400 = vld [vmem:[#allocation10 + $0x1b0] sm:$0xff]
    %v401 = vld [vmem:[#allocation10 + $0x1b8] sm:$0xff]
    %v402 = vld [vmem:[#allocation10 + $0x1c0] sm:$0xff]
    %v403 = vld [vmem:[#allocation10 + $0x1c8] sm:$0xff]
    %v404 = vld [vmem:[#allocation10 + $0x1d0] sm:$0xff]
    %v405 = vld [vmem:[#allocation10 + $0x1d8] sm:$0xff]
    %v406 = vld [vmem:[#allocation10 + $0x1e0] sm:$0xff]
    %v407 = vld [vmem:[#allocation10 + $0x1e8] sm:$0xff]
    %v408 = vld [vmem:[#allocation10 + $0x1f0] sm:$0xff]
    %v409 = vld [vmem:[#allocation10 + $0x1f8] sm:$0xff]
    %v410 = vld [vmem:[#allocation11] sm:$0xf]
    %v412 = vlaneseq
    %v413 = vshrl.u32 %v412, 7
    %v414 = vsub.s32 0, %v413
    %v415 = vrot.slane %v410, %v414
    %v416 = vlaneseq
    %v417 = vshrl.u32 %v416, 7
    %v418 = vsub.s32 1, %v417
    %v419 = vrot.slane %v410, %v418
    %v420 = vlaneseq
    %v421 = vshrl.u32 %v420, 7
    %v422 = vsub.s32 2, %v421
    %v423 = vrot.slane %v410, %v422
    %v424 = vlaneseq
    %v425 = vshrl.u32 %v424, 7
    %v426 = vsub.s32 3, %v425
    %v427 = vrot.slane %v410, %v426
    %v496 = vunpack.c.l.b16 %v346
    %v497 = vunpack.c.h.b16 %v346
    %v498 = vunpack.c.l.b16 %v347
    %v499 = vunpack.c.h.b16 %v347
    %v500 = vunpack.c.l.b16 %v348
    %v501 = vunpack.c.h.b16 %v348
    %v502 = vunpack.c.l.b16 %v349
    %v503 = vunpack.c.h.b16 %v349
    %v504 = vunpack.c.l.b16 %v350
    %v505 = vunpack.c.h.b16 %v350
    %v506 = vunpack.c.l.b16 %v351
    %v507 = vunpack.c.h.b16 %v351
    %v508 = vunpack.c.l.b16 %v352
    %v509 = vunpack.c.h.b16 %v352
    %v510 = vunpack.c.l.b16 %v353
    %v511 = vunpack.c.h.b16 %v353
    %v512 = vunpack.c.l.b16 %v354
    %v513 = vunpack.c.h.b16 %v354
    %v514 = vunpack.c.l.b16 %v355
    %v515 = vunpack.c.h.b16 %v355
    %v516 = vunpack.c.l.b16 %v356
    %v517 = vunpack.c.h.b16 %v356
    %v518 = vunpack.c.l.b16 %v357
    %v519 = vunpack.c.h.b16 %v357
    %v520 = vunpack.c.l.b16 %v358
    %v521 = vunpack.c.h.b16 %v358
    %v522 = vunpack.c.l.b16 %v359
    %v523 = vunpack.c.h.b16 %v359
    %v524 = vunpack.c.l.b16 %v360
    %v525 = vunpack.c.h.b16 %v360
    %v526 = vunpack.c.l.b16 %v361
    %v527 = vunpack.c.h.b16 %v361
    %v528 = vunpack.c.l.b16 %v362
    %v529 = vunpack.c.h.b16 %v362
    %v530 = vunpack.c.l.b16 %v363
    %v531 = vunpack.c.h.b16 %v363
    %v532 = vunpack.c.l.b16 %v364
    %v533 = vunpack.c.h.b16 %v364
    %v534 = vunpack.c.l.b16 %v365
    %v535 = vunpack.c.h.b16 %v365
    %v536 = vunpack.c.l.b16 %v366
    %v537 = vunpack.c.h.b16 %v366
    %v538 = vunpack.c.l.b16 %v367
    %v539 = vunpack.c.h.b16 %v367
    %v540 = vunpack.c.l.b16 %v368
    %v541 = vunpack.c.h.b16 %v368
    %v542 = vunpack.c.l.b16 %v369
    %v543 = vunpack.c.h.b16 %v369
    %v544 = vunpack.c.l.b16 %v370
    %v545 = vunpack.c.h.b16 %v370
    %v546 = vunpack.c.l.b16 %v371
    %v547 = vunpack.c.h.b16 %v371
    %v548 = vunpack.c.l.b16 %v372
    %v549 = vunpack.c.h.b16 %v372
    %v550 = vunpack.c.l.b16 %v373
    %v551 = vunpack.c.h.b16 %v373
    %v552 = vunpack.c.l.b16 %v374
    %v553 = vunpack.c.h.b16 %v374
    %v554 = vunpack.c.l.b16 %v375
    %v555 = vunpack.c.h.b16 %v375
    %v556 = vunpack.c.l.b16 %v376
    %v557 = vunpack.c.h.b16 %v376
    %v558 = vunpack.c.l.b16 %v377
    %v559 = vunpack.c.h.b16 %v377
    %v560 = vunpack.c.l.b16 %v378
    %v561 = vunpack.c.h.b16 %v378
    %v562 = vunpack.c.l.b16 %v379
    %v563 = vunpack.c.h.b16 %v379
    %v564 = vunpack.c.l.b16 %v380
    %v565 = vunpack.c.h.b16 %v380
    %v566 = vunpack.c.l.b16 %v381
    %v567 = vunpack.c.h.b16 %v381
    %v568 = vunpack.c.l.b16 %v382
    %v569 = vunpack.c.h.b16 %v382
    %v570 = vunpack.c.l.b16 %v383
    %v571 = vunpack.c.h.b16 %v383
    %v572 = vunpack.c.l.b16 %v384
    %v573 = vunpack.c.h.b16 %v384
    %v574 = vunpack.c.l.b16 %v385
    %v575 = vunpack.c.h.b16 %v385
    %v576 = vunpack.c.l.b16 %v386
    %v577 = vunpack.c.h.b16 %v386
    %v578 = vunpack.c.l.b16 %v387
    %v579 = vunpack.c.h.b16 %v387
    %v580 = vunpack.c.l.b16 %v388
    %v581 = vunpack.c.h.b16 %v388
    %v582 = vunpack.c.l.b16 %v389
    %v583 = vunpack.c.h.b16 %v389
    %v584 = vunpack.c.l.b16 %v390
    %v585 = vunpack.c.h.b16 %v390
    %v586 = vunpack.c.l.b16 %v391
    %v587 = vunpack.c.h.b16 %v391
    %v588 = vunpack.c.l.b16 %v392
    %v589 = vunpack.c.h.b16 %v392
    %v590 = vunpack.c.l.b16 %v393
    %v591 = vunpack.c.h.b16 %v393
    %v592 = vunpack.c.l.b16 %v394
    %v593 = vunpack.c.h.b16 %v394
    %v594 = vunpack.c.l.b16 %v395
    %v595 = vunpack.c.h.b16 %v395
    %v596 = vunpack.c.l.b16 %v396
    %v597 = vunpack.c.h.b16 %v396
    %v598 = vunpack.c.l.b16 %v397
    %v599 = vunpack.c.h.b16 %v397
    %v600 = vunpack.c.l.b16 %v398
    %v601 = vunpack.c.h.b16 %v398
    %v602 = vunpack.c.l.b16 %v399
    %v603 = vunpack.c.h.b16 %v399
    %v604 = vunpack.c.l.b16 %v400
    %v605 = vunpack.c.h.b16 %v400
    %v606 = vunpack.c.l.b16 %v401
    %v607 = vunpack.c.h.b16 %v401
    %v608 = vunpack.c.l.b16 %v402
    %v609 = vunpack.c.h.b16 %v402
    %v610 = vunpack.c.l.b16 %v403
    %v611 = vunpack.c.h.b16 %v403
    %v612 = vunpack.c.l.b16 %v404
    %v613 = vunpack.c.h.b16 %v404
    %v614 = vunpack.c.l.b16 %v405
    %v615 = vunpack.c.h.b16 %v405
    %v616 = vunpack.c.l.b16 %v406
    %v617 = vunpack.c.h.b16 %v406
    %v618 = vunpack.c.l.b16 %v407
    %v619 = vunpack.c.h.b16 %v407
    %v620 = vunpack.c.l.b16 %v408
    %v621 = vunpack.c.h.b16 %v408
    %v622 = vunpack.c.l.b16 %v409
    %v623 = vunpack.c.h.b16 %v409
    %v624 = vpack.c.b16 %v500, %v496
    %v625 = vpack.c.b16 %v501, %v497
    %v626 = vpack.c.b16 %v502, %v498
    %v627 = vpack.c.b16 %v503, %v499
    %v628 = vpack.c.b16 %v508, %v504
    %v629 = vpack.c.b16 %v509, %v505
    %v630 = vpack.c.b16 %v510, %v506
    %v631 = vpack.c.b16 %v511, %v507
    %v632 = vpack.c.b16 %v516, %v512
    %v633 = vpack.c.b16 %v517, %v513
    %v634 = vpack.c.b16 %v518, %v514
    %v635 = vpack.c.b16 %v519, %v515
    %v636 = vpack.c.b16 %v524, %v520
    %v637 = vpack.c.b16 %v525, %v521
    %v638 = vpack.c.b16 %v526, %v522
    %v639 = vpack.c.b16 %v527, %v523
    %v640 = vpack.c.b16 %v532, %v528
    %v641 = vpack.c.b16 %v533, %v529
    %v642 = vpack.c.b16 %v534, %v530
    %v643 = vpack.c.b16 %v535, %v531
    %v644 = vpack.c.b16 %v540, %v536
    %v645 = vpack.c.b16 %v541, %v537
    %v646 = vpack.c.b16 %v542, %v538
    %v647 = vpack.c.b16 %v543, %v539
    %v648 = vpack.c.b16 %v548, %v544
    %v649 = vpack.c.b16 %v549, %v545
    %v650 = vpack.c.b16 %v550, %v546
    %v651 = vpack.c.b16 %v551, %v547
    %v652 = vpack.c.b16 %v556, %v552
    %v653 = vpack.c.b16 %v557, %v553
    %v654 = vpack.c.b16 %v558, %v554
    %v655 = vpack.c.b16 %v559, %v555
    %v656 = vpack.c.b16 %v564, %v560
    %v657 = vpack.c.b16 %v565, %v561
    %v658 = vpack.c.b16 %v566, %v562
    %v659 = vpack.c.b16 %v567, %v563
    %v660 = vpack.c.b16 %v572, %v568
    %v661 = vpack.c.b16 %v573, %v569
    %v662 = vpack.c.b16 %v574, %v570
    %v663 = vpack.c.b16 %v575, %v571
    %v664 = vpack.c.b16 %v580, %v576
    %v665 = vpack.c.b16 %v581, %v577
    %v666 = vpack.c.b16 %v582, %v578
    %v667 = vpack.c.b16 %v583, %v579
    %v668 = vpack.c.b16 %v588, %v584
    %v669 = vpack.c.b16 %v589, %v585
    %v670 = vpack.c.b16 %v590, %v586
    %v671 = vpack.c.b16 %v591, %v587
    %v672 = vpack.c.b16 %v596, %v592
    %v673 = vpack.c.b16 %v597, %v593
    %v674 = vpack.c.b16 %v598, %v594
    %v675 = vpack.c.b16 %v599, %v595
    %v676 = vpack.c.b16 %v604, %v600
    %v677 = vpack.c.b16 %v605, %v601
    %v678 = vpack.c.b16 %v606, %v602
    %v679 = vpack.c.b16 %v607, %v603
    %v680 = vpack.c.b16 %v612, %v608
    %v681 = vpack.c.b16 %v613, %v609
    %v682 = vpack.c.b16 %v614, %v610
    %v683 = vpack.c.b16 %v615, %v611
    %v684 = vpack.c.b16 %v620, %v616
    %v685 = vpack.c.b16 %v621, %v617
    %v686 = vpack.c.b16 %v622, %v618
    %v687 = vpack.c.b16 %v623, %v619
    %752 = vmatprep.subr.bf16.mxu0 %v625
    %753 = vmatpush1.bf16.msra.mxu0 %v624
    %754 = vmatprep.subr.bf16.mxu0 %v629
    %755 = vmatpush1.bf16.msra.mxu0 %v628
    %756 = vmatprep.subr.bf16.mxu0 %v633
    %757 = vmatpush1.bf16.msra.mxu0 %v632
    %758 = vmatprep.subr.bf16.mxu0 %v637
    %759 = vmatpush1.bf16.msra.mxu0 %v636
    %760 = vmatprep.subr.bf16.mxu0 %v641
    %761 = vmatpush1.bf16.msra.mxu0 %v640
    %762 = vmatprep.subr.bf16.mxu0 %v645
    %763 = vmatpush1.bf16.msra.mxu0 %v644
    %764 = vmatprep.subr.bf16.mxu0 %v649
    %765 = vmatpush1.bf16.msra.mxu0 %v648
    %766 = vmatprep.subr.bf16.mxu0 %v653
    %767 = vmatpush1.bf16.msra.mxu0 %v652
    %768 = vmatprep.subr.bf16.mxu0 %v657
    %769 = vmatpush1.bf16.msra.mxu0 %v656
    %770 = vmatprep.subr.bf16.mxu0 %v661
    %771 = vmatpush1.bf16.msra.mxu0 %v660
    %772 = vmatprep.subr.bf16.mxu0 %v665
    %773 = vmatpush1.bf16.msra.mxu0 %v664
    %774 = vmatprep.subr.bf16.mxu0 %v669
    %775 = vmatpush1.bf16.msra.mxu0 %v668
    %776 = vmatprep.subr.bf16.mxu0 %v673
    %777 = vmatpush1.bf16.msra.mxu0 %v672
    %778 = vmatprep.subr.bf16.mxu0 %v677
    %779 = vmatpush1.bf16.msra.mxu0 %v676
    %780 = vmatprep.subr.bf16.mxu0 %v681
    %781 = vmatpush1.bf16.msra.mxu0 %v680
    %782 = vmatprep.subr.bf16.mxu0 %v685
    %783 = vmatpush1.bf16.msra.mxu0 %v684
    %784 = vmatprep.mubr.bf16.mxu0 %v345
    %785 = vmatmul.mubr.bf16.gmra.mrb[0].mxu0 %v344
    %v786 = vpop.f32.mrb[0].mxu0
    %v787 = vadd.f32 %v415, %v786
    %v788 = vpop.f32.mrb[0].mxu0
    %v789 = vadd.f32 %v419, %v788
    %v790 = vpop.f32.mrb[0].mxu0
    %v791 = vpop.f32.mrb[0].mxu0
    %792 = vdwg.mxu0
    %793 = vmatprep.subr.bf16.mxu0 %v627
    %794 = vmatpush1.bf16.msra.mxu0 %v626
    %795 = vmatprep.subr.bf16.mxu0 %v631
    %796 = vmatpush1.bf16.msra.mxu0 %v630
    %797 = vmatprep.subr.bf16.mxu0 %v635
    %798 = vmatpush1.bf16.msra.mxu0 %v634
    %799 = vmatprep.subr.bf16.mxu0 %v639
    %800 = vmatpush1.bf16.msra.mxu0 %v638
    %801 = vmatprep.subr.bf16.mxu0 %v643
    %802 = vmatpush1.bf16.msra.mxu0 %v642
    %803 = vmatprep.subr.bf16.mxu0 %v647
    %804 = vmatpush1.bf16.msra.mxu0 %v646
    %805 = vmatprep.subr.bf16.mxu0 %v651
    %806 = vmatpush1.bf16.msra.mxu0 %v650
    %807 = vmatprep.subr.bf16.mxu0 %v655
    %808 = vmatpush1.bf16.msra.mxu0 %v654
    %809 = vmatprep.subr.bf16.mxu0 %v659
    %810 = vmatpush1.bf16.msra.mxu0 %v658
    %811 = vmatprep.subr.bf16.mxu0 %v663
    %812 = vmatpush1.bf16.msra.mxu0 %v662
    %813 = vmatprep.subr.bf16.mxu0 %v667
    %814 = vmatpush1.bf16.msra.mxu0 %v666
    %815 = vmatprep.subr.bf16.mxu0 %v671
    %816 = vmatpush1.bf16.msra.mxu0 %v670
    %817 = vmatprep.subr.bf16.mxu0 %v675
    %818 = vmatpush1.bf16.msra.mxu0 %v674
    %819 = vmatprep.subr.bf16.mxu0 %v679
    %820 = vmatpush1.bf16.msra.mxu0 %v678
    %821 = vmatprep.subr.bf16.mxu0 %v683
    %822 = vmatpush1.bf16.msra.mxu0 %v682
    %823 = vmatprep.subr.bf16.mxu0 %v687
    %824 = vmatpush1.bf16.msra.mxu0 %v686
    %825 = vmatprep.mubr.bf16.mxu0 %v345
    %826 = vmatmul.mubr.bf16.gmra.mrb[0].mxu0 %v344
    %v827 = vpop.f32.mrb[0].mxu0
    %v828 = vadd.f32 %v423, %v827
    %v829 = vpop.f32.mrb[0].mxu0
    %v830 = vadd.f32 %v427, %v829
    %v831 = vpop.f32.mrb[0].mxu0
    %v832 = vpop.f32.mrb[0].mxu0
    %833 = vdwg.mxu0
    %v834 = vmax.f32 %v787, 0.0
    %v835 = vmax.f32 %v789, 0.0
    %v836 = vmax.f32 %v828, 0.0
    %v837 = vmax.f32 %v830, 0.0
    %v838 = vpack.c.bf16 %v834, %v834
    %v839 = vpack.c.bf16 %v835, %v835
    %v840 = vpack.c.bf16 %v836, %v836
    %v841 = vpack.c.bf16 %v837, %v837
    %v842 = vld [vmem:[#allocation13] sm:$0xff]
    %v843 = vld [vmem:[#allocation13 + $0x8] sm:$0xff]
    %v844 = vld [vmem:[#allocation13 + $0x10] sm:$0xff]
    %v845 = vld [vmem:[#allocation13 + $0x18] sm:$0xff]
    %v846 = vld [vmem:[#allocation13 + $0x20] sm:$0xff]
    %v847 = vld [vmem:[#allocation13 + $0x28] sm:$0xff]
    %v848 = vld [vmem:[#allocation13 + $0x30] sm:$0xff]
    %v849 = vld [vmem:[#allocation13 + $0x38] sm:$0xff]
    %v850 = vld [vmem:[#allocation13 + $0x40] sm:$0xff]
    %v851 = vld [vmem:[#allocation13 + $0x48] sm:$0xff]
    %v852 = vld [vmem:[#allocation13 + $0x50] sm:$0xff]
    %v853 = vld [vmem:[#allocation13 + $0x58] sm:$0xff]
    %v854 = vld [vmem:[#allocation13 + $0x60] sm:$0xff]
    %v855 = vld [vmem:[#allocation13 + $0x68] sm:$0xff]
    %v856 = vld [vmem:[#allocation13 + $0x70] sm:$0xff]
    %v857 = vld [vmem:[#allocation13 + $0x78] sm:$0xff]
    %v858 = vld [vmem:[#allocation13 + $0x80] sm:$0xff]
    %v859 = vld [vmem:[#allocation13 + $0x88] sm:$0xff]
    %v860 = vld [vmem:[#allocation13 + $0x90] sm:$0xff]
    %v861 = vld [vmem:[#allocation13 + $0x98] sm:$0xff]
    %v862 = vld [vmem:[#allocation13 + $0xa0] sm:$0xff]
    %v863 = vld [vmem:[#allocation13 + $0xa8] sm:$0xff]
    %v864 = vld [vmem:[#allocation13 + $0xb0] sm:$0xff]
    %v865 = vld [vmem:[#allocation13 + $0xb8] sm:$0xff]
    %v866 = vld [vmem:[#allocation13 + $0xc0] sm:$0xff]
    %v867 = vld [vmem:[#allocation13 + $0xc8] sm:$0xff]
    %v868 = vld [vmem:[#allocation13 + $0xd0] sm:$0xff]
    %v869 = vld [vmem:[#allocation13 + $0xd8] sm:$0xff]
    %v870 = vld [vmem:[#allocation13 + $0xe0] sm:$0xff]
    %v871 = vld [vmem:[#allocation13 + $0xe8] sm:$0xff]
    %v872 = vld [vmem:[#allocation13 + $0xf0] sm:$0xff]
    %v873 = vld [vmem:[#allocation13 + $0xf8] sm:$0xff]
    %v874 = vld [vmem:[#allocation13 + $0x100] sm:$0xff]
    %v875 = vld [vmem:[#allocation13 + $0x108] sm:$0xff]
    %v876 = vld [vmem:[#allocation13 + $0x110] sm:$0xff]
    %v877 = vld [vmem:[#allocation13 + $0x118] sm:$0xff]
    %v878 = vld [vmem:[#allocation13 + $0x120] sm:$0xff]
    %v879 = vld [vmem:[#allocation13 + $0x128] sm:$0xff]
    %v880 = vld [vmem:[#allocation13 + $0x130] sm:$0xff]
    %v881 = vld [vmem:[#allocation13 + $0x138] sm:$0xff]
    %v882 = vld [vmem:[#allocation13 + $0x140] sm:$0xff]
    %v883 = vld [vmem:[#allocation13 + $0x148] sm:$0xff]
    %v884 = vld [vmem:[#allocation13 + $0x150] sm:$0xff]
    %v885 = vld [vmem:[#allocation13 + $0x158] sm:$0xff]
    %v886 = vld [vmem:[#allocation13 + $0x160] sm:$0xff]
    %v887 = vld [vmem:[#allocation13 + $0x168] sm:$0xff]
    %v888 = vld [vmem:[#allocation13 + $0x170] sm:$0xff]
    %v889 = vld [vmem:[#allocation13 + $0x178] sm:$0xff]
    %v890 = vld [vmem:[#allocation13 + $0x180] sm:$0xff]
    %v891 = vld [vmem:[#allocation13 + $0x188] sm:$0xff]
    %v892 = vld [vmem:[#allocation13 + $0x190] sm:$0xff]
    %v893 = vld [vmem:[#allocation13 + $0x198] sm:$0xff]
    %v894 = vld [vmem:[#allocation13 + $0x1a0] sm:$0xff]
    %v895 = vld [vmem:[#allocation13 + $0x1a8] sm:$0xff]
    %v896 = vld [vmem:[#allocation13 + $0x1b0] sm:$0xff]
    %v897 = vld [vmem:[#allocation13 + $0x1b8] sm:$0xff]
    %v898 = vld [vmem:[#allocation13 + $0x1c0] sm:$0xff]
    %v899 = vld [vmem:[#allocation13 + $0x1c8] sm:$0xff]
    %v900 = vld [vmem:[#allocation13 + $0x1d0] sm:$0xff]
    %v901 = vld [vmem:[#allocation13 + $0x1d8] sm:$0xff]
    %v902 = vld [vmem:[#allocation13 + $0x1e0] sm:$0xff]
    %v903 = vld [vmem:[#allocation13 + $0x1e8] sm:$0xff]
    %v904 = vld [vmem:[#allocation13 + $0x1f0] sm:$0xff]
    %v905 = vld [vmem:[#allocation13 + $0x1f8] sm:$0xff]
    %v906 = vld [vmem:[#allocation13 + $0x200] sm:$0xff]
    %v907 = vld [vmem:[#allocation13 + $0x208] sm:$0xff]
    %v908 = vld [vmem:[#allocation13 + $0x210] sm:$0xff]
    %v909 = vld [vmem:[#allocation13 + $0x218] sm:$0xff]
    %v910 = vld [vmem:[#allocation13 + $0x220] sm:$0xff]
    %v911 = vld [vmem:[#allocation13 + $0x228] sm:$0xff]
    %v912 = vld [vmem:[#allocation13 + $0x230] sm:$0xff]
    %v913 = vld [vmem:[#allocation13 + $0x238] sm:$0xff]
    %v914 = vld [vmem:[#allocation13 + $0x240] sm:$0xff]
    %v915 = vld [vmem:[#allocation13 + $0x248] sm:$0xff]
    %v916 = vld [vmem:[#allocation13 + $0x250] sm:$0xff]
    %v917 = vld [vmem:[#allocation13 + $0x258] sm:$0xff]
    %v918 = vld [vmem:[#allocation13 + $0x260] sm:$0xff]
    %v919 = vld [vmem:[#allocation13 + $0x268] sm:$0xff]
    %v920 = vld [vmem:[#allocation13 + $0x270] sm:$0xff]
    %v921 = vld [vmem:[#allocation13 + $0x278] sm:$0xff]
    %v922 = vld [vmem:[#allocation13 + $0x280] sm:$0xff]
    %v923 = vld [vmem:[#allocation13 + $0x288] sm:$0xff]
    %v924 = vld [vmem:[#allocation13 + $0x290] sm:$0xff]
    %v925 = vld [vmem:[#allocation13 + $0x298] sm:$0xff]
    %v926 = vld [vmem:[#allocation13 + $0x2a0] sm:$0xff]
    %v927 = vld [vmem:[#allocation13 + $0x2a8] sm:$0xff]
    %v928 = vld [vmem:[#allocation13 + $0x2b0] sm:$0xff]
    %v929 = vld [vmem:[#allocation13 + $0x2b8] sm:$0xff]
    %v930 = vld [vmem:[#allocation13 + $0x2c0] sm:$0xff]
    %v931 = vld [vmem:[#allocation13 + $0x2c8] sm:$0xff]
    %v932 = vld [vmem:[#allocation13 + $0x2d0] sm:$0xff]
    %v933 = vld [vmem:[#allocation13 + $0x2d8] sm:$0xff]
    %v934 = vld [vmem:[#allocation13 + $0x2e0] sm:$0xff]
    %v935 = vld [vmem:[#allocation13 + $0x2e8] sm:$0xff]
    %v936 = vld [vmem:[#allocation13 + $0x2f0] sm:$0xff]
    %v937 = vld [vmem:[#allocation13 + $0x2f8] sm:$0xff]
    %v938 = vld [vmem:[#allocation13 + $0x300] sm:$0xff]
    %v939 = vld [vmem:[#allocation13 + $0x308] sm:$0xff]
    %v940 = vld [vmem:[#allocation13 + $0x310] sm:$0xff]
    %v941 = vld [vmem:[#allocation13 + $0x318] sm:$0xff]
    %v942 = vld [vmem:[#allocation13 + $0x320] sm:$0xff]
    %v943 = vld [vmem:[#allocation13 + $0x328] sm:$0xff]
    %v944 = vld [vmem:[#allocation13 + $0x330] sm:$0xff]
    %v945 = vld [vmem:[#allocation13 + $0x338] sm:$0xff]
    %v946 = vld [vmem:[#allocation13 + $0x340] sm:$0xff]
    %v947 = vld [vmem:[#allocation13 + $0x348] sm:$0xff]
    %v948 = vld [vmem:[#allocation13 + $0x350] sm:$0xff]
    %v949 = vld [vmem:[#allocation13 + $0x358] sm:$0xff]
    %v950 = vld [vmem:[#allocation13 + $0x360] sm:$0xff]
    %v951 = vld [vmem:[#allocation13 + $0x368] sm:$0xff]
    %v952 = vld [vmem:[#allocation13 + $0x370] sm:$0xff]
    %v953 = vld [vmem:[#allocation13 + $0x378] sm:$0xff]
    %v954 = vld [vmem:[#allocation13 + $0x380] sm:$0xff]
    %v955 = vld [vmem:[#allocation13 + $0x388] sm:$0xff]
    %v956 = vld [vmem:[#allocation13 + $0x390] sm:$0xff]
    %v957 = vld [vmem:[#allocation13 + $0x398] sm:$0xff]
    %v958 = vld [vmem:[#allocation13 + $0x3a0] sm:$0xff]
    %v959 = vld [vmem:[#allocation13 + $0x3a8] sm:$0xff]
    %v960 = vld [vmem:[#allocation13 + $0x3b0] sm:$0xff]
    %v961 = vld [vmem:[#allocation13 + $0x3b8] sm:$0xff]
    %v962 = vld [vmem:[#allocation13 + $0x3c0] sm:$0xff]
    %v963 = vld [vmem:[#allocation13 + $0x3c8] sm:$0xff]
    %v964 = vld [vmem:[#allocation13 + $0x3d0] sm:$0xff]
    %v965 = vld [vmem:[#allocation13 + $0x3d8] sm:$0xff]
    %v966 = vld [vmem:[#allocation13 + $0x3e0] sm:$0xff]
    %v967 = vld [vmem:[#allocation13 + $0x3e8] sm:$0xff]
    %v968 = vld [vmem:[#allocation13 + $0x3f0] sm:$0xff]
    %v969 = vld [vmem:[#allocation13 + $0x3f8] sm:$0xff]
    %v970 = vld [vmem:[#allocation13 + $0x400] sm:$0xff]
    %v971 = vld [vmem:[#allocation13 + $0x408] sm:$0xff]
    %v972 = vld [vmem:[#allocation13 + $0x410] sm:$0xff]
    %v973 = vld [vmem:[#allocation13 + $0x418] sm:$0xff]
    %v974 = vld [vmem:[#allocation13 + $0x420] sm:$0xff]
    %v975 = vld [vmem:[#allocation13 + $0x428] sm:$0xff]
    %v976 = vld [vmem:[#allocation13 + $0x430] sm:$0xff]
    %v977 = vld [vmem:[#allocation13 + $0x438] sm:$0xff]
    %v978 = vld [vmem:[#allocation13 + $0x440] sm:$0xff]
    %v979 = vld [vmem:[#allocation13 + $0x448] sm:$0xff]
    %v980 = vld [vmem:[#allocation13 + $0x450] sm:$0xff]
    %v981 = vld [vmem:[#allocation13 + $0x458] sm:$0xff]
    %v982 = vld [vmem:[#allocation13 + $0x460] sm:$0xff]
    %v983 = vld [vmem:[#allocation13 + $0x468] sm:$0xff]
    %v984 = vld [vmem:[#allocation13 + $0x470] sm:$0xff]
    %v985 = vld [vmem:[#allocation13 + $0x478] sm:$0xff]
    %v986 = vld [vmem:[#allocation13 + $0x480] sm:$0xff]
    %v987 = vld [vmem:[#allocation13 + $0x488] sm:$0xff]
    %v988 = vld [vmem:[#allocation13 + $0x490] sm:$0xff]
    %v989 = vld [vmem:[#allocation13 + $0x498] sm:$0xff]
    %v990 = vld [vmem:[#allocation13 + $0x4a0] sm:$0xff]
    %v991 = vld [vmem:[#allocation13 + $0x4a8] sm:$0xff]
    %v992 = vld [vmem:[#allocation13 + $0x4b0] sm:$0xff]
    %v993 = vld [vmem:[#allocation13 + $0x4b8] sm:$0xff]
    %v994 = vld [vmem:[#allocation13 + $0x4c0] sm:$0xff]
    %v995 = vld [vmem:[#allocation13 + $0x4c8] sm:$0xff]
    %v996 = vld [vmem:[#allocation13 + $0x4d0] sm:$0xff]
    %v997 = vld [vmem:[#allocation13 + $0x4d8] sm:$0xff]
    %v998 = vld [vmem:[#allocation13 + $0x4e0] sm:$0xff]
    %v999 = vld [vmem:[#allocation13 + $0x4e8] sm:$0xff]
    %v1000 = vld [vmem:[#allocation13 + $0x4f0] sm:$0xff]
    %v1001 = vld [vmem:[#allocation13 + $0x4f8] sm:$0xff]
    %v1002 = vld [vmem:[#allocation13 + $0x500] sm:$0xff]
    %v1003 = vld [vmem:[#allocation13 + $0x508] sm:$0xff]
    %v1004 = vld [vmem:[#allocation13 + $0x510] sm:$0xff]
    %v1005 = vld [vmem:[#allocation13 + $0x518] sm:$0xff]
    %v1006 = vld [vmem:[#allocation13 + $0x520] sm:$0xff]
    %v1007 = vld [vmem:[#allocation13 + $0x528] sm:$0xff]
    %v1008 = vld [vmem:[#allocation13 + $0x530] sm:$0xff]
    %v1009 = vld [vmem:[#allocation13 + $0x538] sm:$0xff]
    %v1010 = vld [vmem:[#allocation13 + $0x540] sm:$0xff]
    %v1011 = vld [vmem:[#allocation13 + $0x548] sm:$0xff]
    %v1012 = vld [vmem:[#allocation13 + $0x550] sm:$0xff]
    %v1013 = vld [vmem:[#allocation13 + $0x558] sm:$0xff]
    %v1014 = vld [vmem:[#allocation13 + $0x560] sm:$0xff]
    %v1015 = vld [vmem:[#allocation13 + $0x568] sm:$0xff]
    %v1016 = vld [vmem:[#allocation13 + $0x570] sm:$0xff]
    %v1017 = vld [vmem:[#allocation13 + $0x578] sm:$0xff]
    %v1018 = vld [vmem:[#allocation13 + $0x580] sm:$0xff]
    %v1019 = vld [vmem:[#allocation13 + $0x588] sm:$0xff]
    %v1020 = vld [vmem:[#allocation13 + $0x590] sm:$0xff]
    %v1021 = vld [vmem:[#allocation13 + $0x598] sm:$0xff]
    %v1022 = vld [vmem:[#allocation13 + $0x5a0] sm:$0xff]
    %v1023 = vld [vmem:[#allocation13 + $0x5a8] sm:$0xff]
    %v1024 = vld [vmem:[#allocation13 + $0x5b0] sm:$0xff]
    %v1025 = vld [vmem:[#allocation13 + $0x5b8] sm:$0xff]
    %v1026 = vld [vmem:[#allocation13 + $0x5c0] sm:$0xff]
    %v1027 = vld [vmem:[#allocation13 + $0x5c8] sm:$0xff]
    %v1028 = vld [vmem:[#allocation13 + $0x5d0] sm:$0xff]
    %v1029 = vld [vmem:[#allocation13 + $0x5d8] sm:$0xff]
    %v1030 = vld [vmem:[#allocation13 + $0x5e0] sm:$0xff]
    %v1031 = vld [vmem:[#allocation13 + $0x5e8] sm:$0xff]
    %v1032 = vld [vmem:[#allocation13 + $0x5f0] sm:$0xff]
    %v1033 = vld [vmem:[#allocation13 + $0x5f8] sm:$0xff]
    %v1034 = vld [vmem:[#allocation13 + $0x600] sm:$0xff]
    %v1035 = vld [vmem:[#allocation13 + $0x608] sm:$0xff]
    %v1036 = vld [vmem:[#allocation13 + $0x610] sm:$0xff]
    %v1037 = vld [vmem:[#allocation13 + $0x618] sm:$0xff]
    %v1038 = vld [vmem:[#allocation13 + $0x620] sm:$0xff]
    %v1039 = vld [vmem:[#allocation13 + $0x628] sm:$0xff]
    %v1040 = vld [vmem:[#allocation13 + $0x630] sm:$0xff]
    %v1041 = vld [vmem:[#allocation13 + $0x638] sm:$0xff]
    %v1042 = vld [vmem:[#allocation13 + $0x640] sm:$0xff]
    %v1043 = vld [vmem:[#allocation13 + $0x648] sm:$0xff]
    %v1044 = vld [vmem:[#allocation13 + $0x650] sm:$0xff]
    %v1045 = vld [vmem:[#allocation13 + $0x658] sm:$0xff]
    %v1046 = vld [vmem:[#allocation13 + $0x660] sm:$0xff]
    %v1047 = vld [vmem:[#allocation13 + $0x668] sm:$0xff]
    %v1048 = vld [vmem:[#allocation13 + $0x670] sm:$0xff]
    %v1049 = vld [vmem:[#allocation13 + $0x678] sm:$0xff]
    %v1050 = vld [vmem:[#allocation13 + $0x680] sm:$0xff]
    %v1051 = vld [vmem:[#allocation13 + $0x688] sm:$0xff]
    %v1052 = vld [vmem:[#allocation13 + $0x690] sm:$0xff]
    %v1053 = vld [vmem:[#allocation13 + $0x698] sm:$0xff]
    %v1054 = vld [vmem:[#allocation13 + $0x6a0] sm:$0xff]
    %v1055 = vld [vmem:[#allocation13 + $0x6a8] sm:$0xff]
    %v1056 = vld [vmem:[#allocation13 + $0x6b0] sm:$0xff]
    %v1057 = vld [vmem:[#allocation13 + $0x6b8] sm:$0xff]
    %v1058 = vld [vmem:[#allocation13 + $0x6c0] sm:$0xff]
    %v1059 = vld [vmem:[#allocation13 + $0x6c8] sm:$0xff]
    %v1060 = vld [vmem:[#allocation13 + $0x6d0] sm:$0xff]
    %v1061 = vld [vmem:[#allocation13 + $0x6d8] sm:$0xff]
    %v1062 = vld [vmem:[#allocation13 + $0x6e0] sm:$0xff]
    %v1063 = vld [vmem:[#allocation13 + $0x6e8] sm:$0xff]
    %v1064 = vld [vmem:[#allocation13 + $0x6f0] sm:$0xff]
    %v1065 = vld [vmem:[#allocation13 + $0x6f8] sm:$0xff]
    %v1066 = vld [vmem:[#allocation13 + $0x700] sm:$0xff]
    %v1067 = vld [vmem:[#allocation13 + $0x708] sm:$0xff]
    %v1068 = vld [vmem:[#allocation13 + $0x710] sm:$0xff]
    %v1069 = vld [vmem:[#allocation13 + $0x718] sm:$0xff]
    %v1070 = vld [vmem:[#allocation13 + $0x720] sm:$0xff]
    %v1071 = vld [vmem:[#allocation13 + $0x728] sm:$0xff]
    %v1072 = vld [vmem:[#allocation13 + $0x730] sm:$0xff]
    %v1073 = vld [vmem:[#allocation13 + $0x738] sm:$0xff]
    %v1074 = vld [vmem:[#allocation13 + $0x740] sm:$0xff]
    %v1075 = vld [vmem:[#allocation13 + $0x748] sm:$0xff]
    %v1076 = vld [vmem:[#allocation13 + $0x750] sm:$0xff]
    %v1077 = vld [vmem:[#allocation13 + $0x758] sm:$0xff]
    %v1078 = vld [vmem:[#allocation13 + $0x760] sm:$0xff]
    %v1079 = vld [vmem:[#allocation13 + $0x768] sm:$0xff]
    %v1080 = vld [vmem:[#allocation13 + $0x770] sm:$0xff]
    %v1081 = vld [vmem:[#allocation13 + $0x778] sm:$0xff]
    %v1082 = vld [vmem:[#allocation13 + $0x780] sm:$0xff]
    %v1083 = vld [vmem:[#allocation13 + $0x788] sm:$0xff]
    %v1084 = vld [vmem:[#allocation13 + $0x790] sm:$0xff]
    %v1085 = vld [vmem:[#allocation13 + $0x798] sm:$0xff]
    %v1086 = vld [vmem:[#allocation13 + $0x7a0] sm:$0xff]
    %v1087 = vld [vmem:[#allocation13 + $0x7a8] sm:$0xff]
    %v1088 = vld [vmem:[#allocation13 + $0x7b0] sm:$0xff]
    %v1089 = vld [vmem:[#allocation13 + $0x7b8] sm:$0xff]
    %v1090 = vld [vmem:[#allocation13 + $0x7c0] sm:$0xff]
    %v1091 = vld [vmem:[#allocation13 + $0x7c8] sm:$0xff]
    %v1092 = vld [vmem:[#allocation13 + $0x7d0] sm:$0xff]
    %v1093 = vld [vmem:[#allocation13 + $0x7d8] sm:$0xff]
    %v1094 = vld [vmem:[#allocation13 + $0x7e0] sm:$0xff]
    %v1095 = vld [vmem:[#allocation13 + $0x7e8] sm:$0xff]
    %v1096 = vld [vmem:[#allocation13 + $0x7f0] sm:$0xff]
    %v1097 = vld [vmem:[#allocation13 + $0x7f8] sm:$0xff]
    %v1098 = vld [vmem:[#allocation13 + $0x800] sm:$0xff]
    %v1099 = vld [vmem:[#allocation13 + $0x808] sm:$0xff]
    %v1100 = vld [vmem:[#allocation13 + $0x810] sm:$0xff]
    %v1101 = vld [vmem:[#allocation13 + $0x818] sm:$0xff]
    %v1102 = vld [vmem:[#allocation13 + $0x820] sm:$0xff]
    %v1103 = vld [vmem:[#allocation13 + $0x828] sm:$0xff]
    %v1104 = vld [vmem:[#allocation13 + $0x830] sm:$0xff]
    %v1105 = vld [vmem:[#allocation13 + $0x838] sm:$0xff]
    %v1106 = vld [vmem:[#allocation13 + $0x840] sm:$0xff]
    %v1107 = vld [vmem:[#allocation13 + $0x848] sm:$0xff]
    %v1108 = vld [vmem:[#allocation13 + $0x850] sm:$0xff]
    %v1109 = vld [vmem:[#allocation13 + $0x858] sm:$0xff]
    %v1110 = vld [vmem:[#allocation13 + $0x860] sm:$0xff]
    %v1111 = vld [vmem:[#allocation13 + $0x868] sm:$0xff]
    %v1112 = vld [vmem:[#allocation13 + $0x870] sm:$0xff]
    %v1113 = vld [vmem:[#allocation13 + $0x878] sm:$0xff]
    %v1114 = vld [vmem:[#allocation13 + $0x880] sm:$0xff]
    %v1115 = vld [vmem:[#allocation13 + $0x888] sm:$0xff]
    %v1116 = vld [vmem:[#allocation13 + $0x890] sm:$0xff]
    %v1117 = vld [vmem:[#allocation13 + $0x898] sm:$0xff]
    %v1118 = vld [vmem:[#allocation13 + $0x8a0] sm:$0xff]
    %v1119 = vld [vmem:[#allocation13 + $0x8a8] sm:$0xff]
    %v1120 = vld [vmem:[#allocation13 + $0x8b0] sm:$0xff]
    %v1121 = vld [vmem:[#allocation13 + $0x8b8] sm:$0xff]
    %v1122 = vld [vmem:[#allocation13 + $0x8c0] sm:$0xff]
    %v1123 = vld [vmem:[#allocation13 + $0x8c8] sm:$0xff]
    %v1124 = vld [vmem:[#allocation13 + $0x8d0] sm:$0xff]
    %v1125 = vld [vmem:[#allocation13 + $0x8d8] sm:$0xff]
    %v1126 = vld [vmem:[#allocation13 + $0x8e0] sm:$0xff]
    %v1127 = vld [vmem:[#allocation13 + $0x8e8] sm:$0xff]
    %v1128 = vld [vmem:[#allocation13 + $0x8f0] sm:$0xff]
    %v1129 = vld [vmem:[#allocation13 + $0x8f8] sm:$0xff]
    %v1130 = vld [vmem:[#allocation13 + $0x900] sm:$0xff]
    %v1131 = vld [vmem:[#allocation13 + $0x908] sm:$0xff]
    %v1132 = vld [vmem:[#allocation13 + $0x910] sm:$0xff]
    %v1133 = vld [vmem:[#allocation13 + $0x918] sm:$0xff]
    %v1134 = vld [vmem:[#allocation13 + $0x920] sm:$0xff]
    %v1135 = vld [vmem:[#allocation13 + $0x928] sm:$0xff]
    %v1136 = vld [vmem:[#allocation13 + $0x930] sm:$0xff]
    %v1137 = vld [vmem:[#allocation13 + $0x938] sm:$0xff]
    %v1138 = vld [vmem:[#allocation13 + $0x940] sm:$0xff]
    %v1139 = vld [vmem:[#allocation13 + $0x948] sm:$0xff]
    %v1140 = vld [vmem:[#allocation13 + $0x950] sm:$0xff]
    %v1141 = vld [vmem:[#allocation13 + $0x958] sm:$0xff]
    %v1142 = vld [vmem:[#allocation13 + $0x960] sm:$0xff]
    %v1143 = vld [vmem:[#allocation13 + $0x968] sm:$0xff]
    %v1144 = vld [vmem:[#allocation13 + $0x970] sm:$0xff]
    %v1145 = vld [vmem:[#allocation13 + $0x978] sm:$0xff]
    %v1146 = vld [vmem:[#allocation13 + $0x980] sm:$0xff]
    %v1147 = vld [vmem:[#allocation13 + $0x988] sm:$0xff]
    %v1148 = vld [vmem:[#allocation13 + $0x990] sm:$0xff]
    %v1149 = vld [vmem:[#allocation13 + $0x998] sm:$0xff]
    %v1150 = vld [vmem:[#allocation13 + $0x9a0] sm:$0xff]
    %v1151 = vld [vmem:[#allocation13 + $0x9a8] sm:$0xff]
    %v1152 = vld [vmem:[#allocation13 + $0x9b0] sm:$0xff]
    %v1153 = vld [vmem:[#allocation13 + $0x9b8] sm:$0xff]
    %v1154 = vld [vmem:[#allocation13 + $0x9c0] sm:$0xff]
    %v1155 = vld [vmem:[#allocation13 + $0x9c8] sm:$0xff]
    %v1156 = vld [vmem:[#allocation13 + $0x9d0] sm:$0xff]
    %v1157 = vld [vmem:[#allocation13 + $0x9d8] sm:$0xff]
    %v1158 = vld [vmem:[#allocation13 + $0x9e0] sm:$0xff]
    %v1159 = vld [vmem:[#allocation13 + $0x9e8] sm:$0xff]
    %v1160 = vld [vmem:[#allocation13 + $0x9f0] sm:$0xff]
    %v1161 = vld [vmem:[#allocation13 + $0x9f8] sm:$0xff]
    %v1162 = vld [vmem:[#allocation14] sm:$0xff]
    %v1163 = vld [vmem:[#allocation14 + $0x8] sm:$0x3]
    %v1166 = vlaneseq
    %v1167 = vshrl.u32 %v1166, 7
    %v1168 = vsub.s32 0, %v1167
    %v1169 = vrot.slane %v1162, %v1168
    %v1170 = vlaneseq
    %v1171 = vshrl.u32 %v1170, 7
    %v1172 = vsub.s32 1, %v1171
    %v1173 = vrot.slane %v1162, %v1172
    %v1174 = vlaneseq
    %v1175 = vshrl.u32 %v1174, 7
    %v1176 = vsub.s32 2, %v1175
    %v1177 = vrot.slane %v1162, %v1176
    %v1178 = vlaneseq
    %v1179 = vshrl.u32 %v1178, 7
    %v1180 = vsub.s32 3, %v1179
    %v1181 = vrot.slane %v1162, %v1180
    %v1182 = vlaneseq
    %v1183 = vshrl.u32 %v1182, 7
    %v1184 = vsub.s32 4, %v1183
    %v1185 = vrot.slane %v1162, %v1184
    %v1186 = vlaneseq
    %v1187 = vshrl.u32 %v1186, 7
    %v1188 = vsub.s32 5, %v1187
    %v1189 = vrot.slane %v1162, %v1188
    %v1190 = vlaneseq
    %v1191 = vshrl.u32 %v1190, 7
    %v1192 = vsub.s32 6, %v1191
    %v1193 = vrot.slane %v1162, %v1192
    %v1194 = vlaneseq
    %v1195 = vshrl.u32 %v1194, 7
    %v1196 = vsub.s32 7, %v1195
    %v1197 = vrot.slane %v1162, %v1196
    %v1198 = vlaneseq
    %v1199 = vshrl.u32 %v1198, 7
    %v1200 = vsub.s32 0, %v1199
    %v1201 = vrot.slane %v1163, %v1200
    %v1202 = vlaneseq
    %v1203 = vshrl.u32 %v1202, 7
    %v1204 = vsub.s32 1, %v1203
    %v1205 = vrot.slane %v1163, %v1204
    %v1536 = vunpack.c.l.b16 %v842
    %v1537 = vunpack.c.h.b16 %v842
    %v1538 = vunpack.c.l.b16 %v843
    %v1539 = vunpack.c.h.b16 %v843
    %v1540 = vunpack.c.l.b16 %v844
    %v1541 = vunpack.c.h.b16 %v844
    %v1542 = vunpack.c.l.b16 %v845
    %v1543 = vunpack.c.h.b16 %v845
    %v1544 = vunpack.c.l.b16 %v846
    %v1545 = vunpack.c.h.b16 %v846
    %v1546 = vunpack.c.l.b16 %v847
    %v1547 = vunpack.c.h.b16 %v847
    %v1548 = vunpack.c.l.b16 %v848
    %v1549 = vunpack.c.h.b16 %v848
    %v1550 = vunpack.c.l.b16 %v849
    %v1551 = vunpack.c.h.b16 %v849
    %v1552 = vunpack.c.l.b16 %v850
    %v1553 = vunpack.c.h.b16 %v850
    %v1554 = vunpack.c.l.b16 %v851
    %v1555 = vunpack.c.h.b16 %v851
    %v1556 = vunpack.c.l.b16 %v852
    %v1557 = vunpack.c.h.b16 %v852
    %v1558 = vunpack.c.l.b16 %v853
    %v1559 = vunpack.c.h.b16 %v853
    %v1560 = vunpack.c.l.b16 %v854
    %v1561 = vunpack.c.h.b16 %v854
    %v1562 = vunpack.c.l.b16 %v855
    %v1563 = vunpack.c.h.b16 %v855
    %v1564 = vunpack.c.l.b16 %v856
    %v1565 = vunpack.c.h.b16 %v856
    %v1566 = vunpack.c.l.b16 %v857
    %v1567 = vunpack.c.h.b16 %v857
    %v1568 = vunpack.c.l.b16 %v858
    %v1569 = vunpack.c.h.b16 %v858
    %v1570 = vunpack.c.l.b16 %v859
    %v1571 = vunpack.c.h.b16 %v859
    %v1572 = vunpack.c.l.b16 %v860
    %v1573 = vunpack.c.h.b16 %v860
    %v1574 = vunpack.c.l.b16 %v861
    %v1575 = vunpack.c.h.b16 %v861
    %v1576 = vunpack.c.l.b16 %v862
    %v1577 = vunpack.c.h.b16 %v862
    %v1578 = vunpack.c.l.b16 %v863
    %v1579 = vunpack.c.h.b16 %v863
    %v1580 = vunpack.c.l.b16 %v864
    %v1581 = vunpack.c.h.b16 %v864
    %v1582 = vunpack.c.l.b16 %v865
    %v1583 = vunpack.c.h.b16 %v865
    %v1584 = vunpack.c.l.b16 %v866
    %v1585 = vunpack.c.h.b16 %v866
    %v1586 = vunpack.c.l.b16 %v867
    %v1587 = vunpack.c.h.b16 %v867
    %v1588 = vunpack.c.l.b16 %v868
    %v1589 = vunpack.c.h.b16 %v868
    %v1590 = vunpack.c.l.b16 %v869
    %v1591 = vunpack.c.h.b16 %v869
    %v1592 = vunpack.c.l.b16 %v870
    %v1593 = vunpack.c.h.b16 %v870
    %v1594 = vunpack.c.l.b16 %v871
    %v1595 = vunpack.c.h.b16 %v871
    %v1596 = vunpack.c.l.b16 %v872
    %v1597 = vunpack.c.h.b16 %v872
    %v1598 = vunpack.c.l.b16 %v873
    %v1599 = vunpack.c.h.b16 %v873
    %v1600 = vunpack.c.l.b16 %v874
    %v1601 = vunpack.c.h.b16 %v874
    %v1602 = vunpack.c.l.b16 %v875
    %v1603 = vunpack.c.h.b16 %v875
    %v1604 = vunpack.c.l.b16 %v876
    %v1605 = vunpack.c.h.b16 %v876
    %v1606 = vunpack.c.l.b16 %v877
    %v1607 = vunpack.c.h.b16 %v877
    %v1608 = vunpack.c.l.b16 %v878
    %v1609 = vunpack.c.h.b16 %v878
    %v1610 = vunpack.c.l.b16 %v879
    %v1611 = vunpack.c.h.b16 %v879
    %v1612 = vunpack.c.l.b16 %v880
    %v1613 = vunpack.c.h.b16 %v880
    %v1614 = vunpack.c.l.b16 %v881
    %v1615 = vunpack.c.h.b16 %v881
    %v1616 = vunpack.c.l.b16 %v882
    %v1617 = vunpack.c.h.b16 %v882
    %v1618 = vunpack.c.l.b16 %v883
    %v1619 = vunpack.c.h.b16 %v883
    %v1620 = vunpack.c.l.b16 %v884
    %v1621 = vunpack.c.h.b16 %v884
    %v1622 = vunpack.c.l.b16 %v885
    %v1623 = vunpack.c.h.b16 %v885
    %v1624 = vunpack.c.l.b16 %v886
    %v1625 = vunpack.c.h.b16 %v886
    %v1626 = vunpack.c.l.b16 %v887
    %v1627 = vunpack.c.h.b16 %v887
    %v1628 = vunpack.c.l.b16 %v888
    %v1629 = vunpack.c.h.b16 %v888
    %v1630 = vunpack.c.l.b16 %v889
    %v1631 = vunpack.c.h.b16 %v889
    %v1632 = vunpack.c.l.b16 %v890
    %v1633 = vunpack.c.h.b16 %v890
    %v1634 = vunpack.c.l.b16 %v891
    %v1635 = vunpack.c.h.b16 %v891
    %v1636 = vunpack.c.l.b16 %v892
    %v1637 = vunpack.c.h.b16 %v892
    %v1638 = vunpack.c.l.b16 %v893
    %v1639 = vunpack.c.h.b16 %v893
    %v1640 = vunpack.c.l.b16 %v894
    %v1641 = vunpack.c.h.b16 %v894
    %v1642 = vunpack.c.l.b16 %v895
    %v1643 = vunpack.c.h.b16 %v895
    %v1644 = vunpack.c.l.b16 %v896
    %v1645 = vunpack.c.h.b16 %v896
    %v1646 = vunpack.c.l.b16 %v897
    %v1647 = vunpack.c.h.b16 %v897
    %v1648 = vunpack.c.l.b16 %v898
    %v1649 = vunpack.c.h.b16 %v898
    %v1650 = vunpack.c.l.b16 %v899
    %v1651 = vunpack.c.h.b16 %v899
    %v1652 = vunpack.c.l.b16 %v900
    %v1653 = vunpack.c.h.b16 %v900
    %v1654 = vunpack.c.l.b16 %v901
    %v1655 = vunpack.c.h.b16 %v901
    %v1656 = vunpack.c.l.b16 %v902
    %v1657 = vunpack.c.h.b16 %v902
    %v1658 = vunpack.c.l.b16 %v903
    %v1659 = vunpack.c.h.b16 %v903
    %v1660 = vunpack.c.l.b16 %v904
    %v1661 = vunpack.c.h.b16 %v904
    %v1662 = vunpack.c.l.b16 %v905
    %v1663 = vunpack.c.h.b16 %v905
    %v1664 = vunpack.c.l.b16 %v906
    %v1665 = vunpack.c.h.b16 %v906
    %v1666 = vunpack.c.l.b16 %v907
    %v1667 = vunpack.c.h.b16 %v907
    %v1668 = vunpack.c.l.b16 %v908
    %v1669 = vunpack.c.h.b16 %v908
    %v1670 = vunpack.c.l.b16 %v909
    %v1671 = vunpack.c.h.b16 %v909
    %v1672 = vunpack.c.l.b16 %v910
    %v1673 = vunpack.c.h.b16 %v910
    %v1674 = vunpack.c.l.b16 %v911
    %v1675 = vunpack.c.h.b16 %v911
    %v1676 = vunpack.c.l.b16 %v912
    %v1677 = vunpack.c.h.b16 %v912
    %v1678 = vunpack.c.l.b16 %v913
    %v1679 = vunpack.c.h.b16 %v913
    %v1680 = vunpack.c.l.b16 %v914
    %v1681 = vunpack.c.h.b16 %v914
    %v1682 = vunpack.c.l.b16 %v915
    %v1683 = vunpack.c.h.b16 %v915
    %v1684 = vunpack.c.l.b16 %v916
    %v1685 = vunpack.c.h.b16 %v916
    %v1686 = vunpack.c.l.b16 %v917
    %v1687 = vunpack.c.h.b16 %v917
    %v1688 = vunpack.c.l.b16 %v918
    %v1689 = vunpack.c.h.b16 %v918
    %v1690 = vunpack.c.l.b16 %v919
    %v1691 = vunpack.c.h.b16 %v919
    %v1692 = vunpack.c.l.b16 %v920
    %v1693 = vunpack.c.h.b16 %v920
    %v1694 = vunpack.c.l.b16 %v921
    %v1695 = vunpack.c.h.b16 %v921
    %v1696 = vunpack.c.l.b16 %v922
    %v1697 = vunpack.c.h.b16 %v922
    %v1698 = vunpack.c.l.b16 %v923
    %v1699 = vunpack.c.h.b16 %v923
    %v1700 = vunpack.c.l.b16 %v924
    %v1701 = vunpack.c.h.b16 %v924
    %v1702 = vunpack.c.l.b16 %v925
    %v1703 = vunpack.c.h.b16 %v925
    %v1704 = vunpack.c.l.b16 %v926
    %v1705 = vunpack.c.h.b16 %v926
    %v1706 = vunpack.c.l.b16 %v927
    %v1707 = vunpack.c.h.b16 %v927
    %v1708 = vunpack.c.l.b16 %v928
    %v1709 = vunpack.c.h.b16 %v928
    %v1710 = vunpack.c.l.b16 %v929
    %v1711 = vunpack.c.h.b16 %v929
    %v1712 = vunpack.c.l.b16 %v930
    %v1713 = vunpack.c.h.b16 %v930
    %v1714 = vunpack.c.l.b16 %v931
    %v1715 = vunpack.c.h.b16 %v931
    %v1716 = vunpack.c.l.b16 %v932
    %v1717 = vunpack.c.h.b16 %v932
    %v1718 = vunpack.c.l.b16 %v933
    %v1719 = vunpack.c.h.b16 %v933
    %v1720 = vunpack.c.l.b16 %v934
    %v1721 = vunpack.c.h.b16 %v934
    %v1722 = vunpack.c.l.b16 %v935
    %v1723 = vunpack.c.h.b16 %v935
    %v1724 = vunpack.c.l.b16 %v936
    %v1725 = vunpack.c.h.b16 %v936
    %v1726 = vunpack.c.l.b16 %v937
    %v1727 = vunpack.c.h.b16 %v937
    %v1728 = vunpack.c.l.b16 %v938
    %v1729 = vunpack.c.h.b16 %v938
    %v1730 = vunpack.c.l.b16 %v939
    %v1731 = vunpack.c.h.b16 %v939
    %v1732 = vunpack.c.l.b16 %v940
    %v1733 = vunpack.c.h.b16 %v940
    %v1734 = vunpack.c.l.b16 %v941
    %v1735 = vunpack.c.h.b16 %v941
    %v1736 = vunpack.c.l.b16 %v942
    %v1737 = vunpack.c.h.b16 %v942
    %v1738 = vunpack.c.l.b16 %v943
    %v1739 = vunpack.c.h.b16 %v943
    %v1740 = vunpack.c.l.b16 %v944
    %v1741 = vunpack.c.h.b16 %v944
    %v1742 = vunpack.c.l.b16 %v945
    %v1743 = vunpack.c.h.b16 %v945
    %v1744 = vunpack.c.l.b16 %v946
    %v1745 = vunpack.c.h.b16 %v946
    %v1746 = vunpack.c.l.b16 %v947
    %v1747 = vunpack.c.h.b16 %v947
    %v1748 = vunpack.c.l.b16 %v948
    %v1749 = vunpack.c.h.b16 %v948
    %v1750 = vunpack.c.l.b16 %v949
    %v1751 = vunpack.c.h.b16 %v949
    %v1752 = vunpack.c.l.b16 %v950
    %v1753 = vunpack.c.h.b16 %v950
    %v1754 = vunpack.c.l.b16 %v951
    %v1755 = vunpack.c.h.b16 %v951
    %v1756 = vunpack.c.l.b16 %v952
    %v1757 = vunpack.c.h.b16 %v952
    %v1758 = vunpack.c.l.b16 %v953
    %v1759 = vunpack.c.h.b16 %v953
    %v1760 = vunpack.c.l.b16 %v954
    %v1761 = vunpack.c.h.b16 %v954
    %v1762 = vunpack.c.l.b16 %v955
    %v1763 = vunpack.c.h.b16 %v955
    %v1764 = vunpack.c.l.b16 %v956
    %v1765 = vunpack.c.h.b16 %v956
    %v1766 = vunpack.c.l.b16 %v957
    %v1767 = vunpack.c.h.b16 %v957
    %v1768 = vunpack.c.l.b16 %v958
    %v1769 = vunpack.c.h.b16 %v958
    %v1770 = vunpack.c.l.b16 %v959
    %v1771 = vunpack.c.h.b16 %v959
    %v1772 = vunpack.c.l.b16 %v960
    %v1773 = vunpack.c.h.b16 %v960
    %v1774 = vunpack.c.l.b16 %v961
    %v1775 = vunpack.c.h.b16 %v961
    %v1776 = vunpack.c.l.b16 %v962
    %v1777 = vunpack.c.h.b16 %v962
    %v1778 = vunpack.c.l.b16 %v963
    %v1779 = vunpack.c.h.b16 %v963
    %v1780 = vunpack.c.l.b16 %v964
    %v1781 = vunpack.c.h.b16 %v964
    %v1782 = vunpack.c.l.b16 %v965
    %v1783 = vunpack.c.h.b16 %v965
    %v1784 = vunpack.c.l.b16 %v966
    %v1785 = vunpack.c.h.b16 %v966
    %v1786 = vunpack.c.l.b16 %v967
    %v1787 = vunpack.c.h.b16 %v967
    %v1788 = vunpack.c.l.b16 %v968
    %v1789 = vunpack.c.h.b16 %v968
    %v1790 = vunpack.c.l.b16 %v969
    %v1791 = vunpack.c.h.b16 %v969
    %v1792 = vunpack.c.l.b16 %v970
    %v1793 = vunpack.c.h.b16 %v970
    %v1794 = vunpack.c.l.b16 %v971
    %v1795 = vunpack.c.h.b16 %v971
    %v1796 = vunpack.c.l.b16 %v972
    %v1797 = vunpack.c.h.b16 %v972
    %v1798 = vunpack.c.l.b16 %v973
    %v1799 = vunpack.c.h.b16 %v973
    %v1800 = vunpack.c.l.b16 %v974
    %v1801 = vunpack.c.h.b16 %v974
    %v1802 = vunpack.c.l.b16 %v975
    %v1803 = vunpack.c.h.b16 %v975
    %v1804 = vunpack.c.l.b16 %v976
    %v1805 = vunpack.c.h.b16 %v976
    %v1806 = vunpack.c.l.b16 %v977
    %v1807 = vunpack.c.h.b16 %v977
    %v1808 = vunpack.c.l.b16 %v978
    %v1809 = vunpack.c.h.b16 %v978
    %v1810 = vunpack.c.l.b16 %v979
    %v1811 = vunpack.c.h.b16 %v979
    %v1812 = vunpack.c.l.b16 %v980
    %v1813 = vunpack.c.h.b16 %v980
    %v1814 = vunpack.c.l.b16 %v981
    %v1815 = vunpack.c.h.b16 %v981
    %v1816 = vunpack.c.l.b16 %v982
    %v1817 = vunpack.c.h.b16 %v982
    %v1818 = vunpack.c.l.b16 %v983
    %v1819 = vunpack.c.h.b16 %v983
    %v1820 = vunpack.c.l.b16 %v984
    %v1821 = vunpack.c.h.b16 %v984
    %v1822 = vunpack.c.l.b16 %v985
    %v1823 = vunpack.c.h.b16 %v985
    %v1824 = vunpack.c.l.b16 %v986
    %v1825 = vunpack.c.h.b16 %v986
    %v1826 = vunpack.c.l.b16 %v987
    %v1827 = vunpack.c.h.b16 %v987
    %v1828 = vunpack.c.l.b16 %v988
    %v1829 = vunpack.c.h.b16 %v988
    %v1830 = vunpack.c.l.b16 %v989
    %v1831 = vunpack.c.h.b16 %v989
    %v1832 = vunpack.c.l.b16 %v990
    %v1833 = vunpack.c.h.b16 %v990
    %v1834 = vunpack.c.l.b16 %v991
    %v1835 = vunpack.c.h.b16 %v991
    %v1836 = vunpack.c.l.b16 %v992
    %v1837 = vunpack.c.h.b16 %v992
    %v1838 = vunpack.c.l.b16 %v993
    %v1839 = vunpack.c.h.b16 %v993
    %v1840 = vunpack.c.l.b16 %v994
    %v1841 = vunpack.c.h.b16 %v994
    %v1842 = vunpack.c.l.b16 %v995
    %v1843 = vunpack.c.h.b16 %v995
    %v1844 = vunpack.c.l.b16 %v996
    %v1845 = vunpack.c.h.b16 %v996
    %v1846 = vunpack.c.l.b16 %v997
    %v1847 = vunpack.c.h.b16 %v997
    %v1848 = vunpack.c.l.b16 %v998
    %v1849 = vunpack.c.h.b16 %v998
    %v1850 = vunpack.c.l.b16 %v999
    %v1851 = vunpack.c.h.b16 %v999
    %v1852 = vunpack.c.l.b16 %v1000
    %v1853 = vunpack.c.h.b16 %v1000
    %v1854 = vunpack.c.l.b16 %v1001
    %v1855 = vunpack.c.h.b16 %v1001
    %v1856 = vunpack.c.l.b16 %v1002
    %v1857 = vunpack.c.h.b16 %v1002
    %v1858 = vunpack.c.l.b16 %v1003
    %v1859 = vunpack.c.h.b16 %v1003
    %v1860 = vunpack.c.l.b16 %v1004
    %v1861 = vunpack.c.h.b16 %v1004
    %v1862 = vunpack.c.l.b16 %v1005
    %v1863 = vunpack.c.h.b16 %v1005
    %v1864 = vunpack.c.l.b16 %v1006
    %v1865 = vunpack.c.h.b16 %v1006
    %v1866 = vunpack.c.l.b16 %v1007
    %v1867 = vunpack.c.h.b16 %v1007
    %v1868 = vunpack.c.l.b16 %v1008
    %v1869 = vunpack.c.h.b16 %v1008
    %v1870 = vunpack.c.l.b16 %v1009
    %v1871 = vunpack.c.h.b16 %v1009
    %v1872 = vunpack.c.l.b16 %v1010
    %v1873 = vunpack.c.h.b16 %v1010
    %v1874 = vunpack.c.l.b16 %v1011
    %v1875 = vunpack.c.h.b16 %v1011
    %v1876 = vunpack.c.l.b16 %v1012
    %v1877 = vunpack.c.h.b16 %v1012
    %v1878 = vunpack.c.l.b16 %v1013
    %v1879 = vunpack.c.h.b16 %v1013
    %v1880 = vunpack.c.l.b16 %v1014
    %v1881 = vunpack.c.h.b16 %v1014
    %v1882 = vunpack.c.l.b16 %v1015
    %v1883 = vunpack.c.h.b16 %v1015
    %v1884 = vunpack.c.l.b16 %v1016
    %v1885 = vunpack.c.h.b16 %v1016
    %v1886 = vunpack.c.l.b16 %v1017
    %v1887 = vunpack.c.h.b16 %v1017
    %v1888 = vunpack.c.l.b16 %v1018
    %v1889 = vunpack.c.h.b16 %v1018
    %v1890 = vunpack.c.l.b16 %v1019
    %v1891 = vunpack.c.h.b16 %v1019
    %v1892 = vunpack.c.l.b16 %v1020
    %v1893 = vunpack.c.h.b16 %v1020
    %v1894 = vunpack.c.l.b16 %v1021
    %v1895 = vunpack.c.h.b16 %v1021
    %v1896 = vunpack.c.l.b16 %v1022
    %v1897 = vunpack.c.h.b16 %v1022
    %v1898 = vunpack.c.l.b16 %v1023
    %v1899 = vunpack.c.h.b16 %v1023
    %v1900 = vunpack.c.l.b16 %v1024
    %v1901 = vunpack.c.h.b16 %v1024
    %v1902 = vunpack.c.l.b16 %v1025
    %v1903 = vunpack.c.h.b16 %v1025
    %v1904 = vunpack.c.l.b16 %v1026
    %v1905 = vunpack.c.h.b16 %v1026
    %v1906 = vunpack.c.l.b16 %v1027
    %v1907 = vunpack.c.h.b16 %v1027
    %v1908 = vunpack.c.l.b16 %v1028
    %v1909 = vunpack.c.h.b16 %v1028
    %v1910 = vunpack.c.l.b16 %v1029
    %v1911 = vunpack.c.h.b16 %v1029
    %v1912 = vunpack.c.l.b16 %v1030
    %v1913 = vunpack.c.h.b16 %v1030
    %v1914 = vunpack.c.l.b16 %v1031
    %v1915 = vunpack.c.h.b16 %v1031
    %v1916 = vunpack.c.l.b16 %v1032
    %v1917 = vunpack.c.h.b16 %v1032
    %v1918 = vunpack.c.l.b16 %v1033
    %v1919 = vunpack.c.h.b16 %v1033
    %v1920 = vunpack.c.l.b16 %v1034
    %v1921 = vunpack.c.h.b16 %v1034
    %v1922 = vunpack.c.l.b16 %v1035
    %v1923 = vunpack.c.h.b16 %v1035
    %v1924 = vunpack.c.l.b16 %v1036
    %v1925 = vunpack.c.h.b16 %v1036
    %v1926 = vunpack.c.l.b16 %v1037
    %v1927 = vunpack.c.h.b16 %v1037
    %v1928 = vunpack.c.l.b16 %v1038
    %v1929 = vunpack.c.h.b16 %v1038
    %v1930 = vunpack.c.l.b16 %v1039
    %v1931 = vunpack.c.h.b16 %v1039
    %v1932 = vunpack.c.l.b16 %v1040
    %v1933 = vunpack.c.h.b16 %v1040
    %v1934 = vunpack.c.l.b16 %v1041
    %v1935 = vunpack.c.h.b16 %v1041
    %v1936 = vunpack.c.l.b16 %v1042
    %v1937 = vunpack.c.h.b16 %v1042
    %v1938 = vunpack.c.l.b16 %v1043
    %v1939 = vunpack.c.h.b16 %v1043
    %v1940 = vunpack.c.l.b16 %v1044
    %v1941 = vunpack.c.h.b16 %v1044
    %v1942 = vunpack.c.l.b16 %v1045
    %v1943 = vunpack.c.h.b16 %v1045
    %v1944 = vunpack.c.l.b16 %v1046
    %v1945 = vunpack.c.h.b16 %v1046
    %v1946 = vunpack.c.l.b16 %v1047
    %v1947 = vunpack.c.h.b16 %v1047
    %v1948 = vunpack.c.l.b16 %v1048
    %v1949 = vunpack.c.h.b16 %v1048
    %v1950 = vunpack.c.l.b16 %v1049
    %v1951 = vunpack.c.h.b16 %v1049
    %v1952 = vunpack.c.l.b16 %v1050
    %v1953 = vunpack.c.h.b16 %v1050
    %v1954 = vunpack.c.l.b16 %v1051
    %v1955 = vunpack.c.h.b16 %v1051
    %v1956 = vunpack.c.l.b16 %v1052
    %v1957 = vunpack.c.h.b16 %v1052
    %v1958 = vunpack.c.l.b16 %v1053
    %v1959 = vunpack.c.h.b16 %v1053
    %v1960 = vunpack.c.l.b16 %v1054
    %v1961 = vunpack.c.h.b16 %v1054
    %v1962 = vunpack.c.l.b16 %v1055
    %v1963 = vunpack.c.h.b16 %v1055
    %v1964 = vunpack.c.l.b16 %v1056
    %v1965 = vunpack.c.h.b16 %v1056
    %v1966 = vunpack.c.l.b16 %v1057
    %v1967 = vunpack.c.h.b16 %v1057
    %v1968 = vunpack.c.l.b16 %v1058
    %v1969 = vunpack.c.h.b16 %v1058
    %v1970 = vunpack.c.l.b16 %v1059
    %v1971 = vunpack.c.h.b16 %v1059
    %v1972 = vunpack.c.l.b16 %v1060
    %v1973 = vunpack.c.h.b16 %v1060
    %v1974 = vunpack.c.l.b16 %v1061
    %v1975 = vunpack.c.h.b16 %v1061
    %v1976 = vunpack.c.l.b16 %v1062
    %v1977 = vunpack.c.h.b16 %v1062
    %v1978 = vunpack.c.l.b16 %v1063
    %v1979 = vunpack.c.h.b16 %v1063
    %v1980 = vunpack.c.l.b16 %v1064
    %v1981 = vunpack.c.h.b16 %v1064
    %v1982 = vunpack.c.l.b16 %v1065
    %v1983 = vunpack.c.h.b16 %v1065
    %v1984 = vunpack.c.l.b16 %v1066
    %v1985 = vunpack.c.h.b16 %v1066
    %v1986 = vunpack.c.l.b16 %v1067
    %v1987 = vunpack.c.h.b16 %v1067
    %v1988 = vunpack.c.l.b16 %v1068
    %v1989 = vunpack.c.h.b16 %v1068
    %v1990 = vunpack.c.l.b16 %v1069
    %v1991 = vunpack.c.h.b16 %v1069
    %v1992 = vunpack.c.l.b16 %v1070
    %v1993 = vunpack.c.h.b16 %v1070
    %v1994 = vunpack.c.l.b16 %v1071
    %v1995 = vunpack.c.h.b16 %v1071
    %v1996 = vunpack.c.l.b16 %v1072
    %v1997 = vunpack.c.h.b16 %v1072
    %v1998 = vunpack.c.l.b16 %v1073
    %v1999 = vunpack.c.h.b16 %v1073
    %v2000 = vunpack.c.l.b16 %v1074
    %v2001 = vunpack.c.h.b16 %v1074
    %v2002 = vunpack.c.l.b16 %v1075
    %v2003 = vunpack.c.h.b16 %v1075
    %v2004 = vunpack.c.l.b16 %v1076
    %v2005 = vunpack.c.h.b16 %v1076
    %v2006 = vunpack.c.l.b16 %v1077
    %v2007 = vunpack.c.h.b16 %v1077
    %v2008 = vunpack.c.l.b16 %v1078
    %v2009 = vunpack.c.h.b16 %v1078
    %v2010 = vunpack.c.l.b16 %v1079
    %v2011 = vunpack.c.h.b16 %v1079
    %v2012 = vunpack.c.l.b16 %v1080
    %v2013 = vunpack.c.h.b16 %v1080
    %v2014 = vunpack.c.l.b16 %v1081
    %v2015 = vunpack.c.h.b16 %v1081
    %v2016 = vunpack.c.l.b16 %v1082
    %v2017 = vunpack.c.h.b16 %v1082
    %v2018 = vunpack.c.l.b16 %v1083
    %v2019 = vunpack.c.h.b16 %v1083
    %v2020 = vunpack.c.l.b16 %v1084
    %v2021 = vunpack.c.h.b16 %v1084
    %v2022 = vunpack.c.l.b16 %v1085
    %v2023 = vunpack.c.h.b16 %v1085
    %v2024 = vunpack.c.l.b16 %v1086
    %v2025 = vunpack.c.h.b16 %v1086
    %v2026 = vunpack.c.l.b16 %v1087
    %v2027 = vunpack.c.h.b16 %v1087
    %v2028 = vunpack.c.l.b16 %v1088
    %v2029 = vunpack.c.h.b16 %v1088
    %v2030 = vunpack.c.l.b16 %v1089
    %v2031 = vunpack.c.h.b16 %v1089
    %v2032 = vunpack.c.l.b16 %v1090
    %v2033 = vunpack.c.h.b16 %v1090
    %v2034 = vunpack.c.l.b16 %v1091
    %v2035 = vunpack.c.h.b16 %v1091
    %v2036 = vunpack.c.l.b16 %v1092
    %v2037 = vunpack.c.h.b16 %v1092
    %v2038 = vunpack.c.l.b16 %v1093
    %v2039 = vunpack.c.h.b16 %v1093
    %v2040 = vunpack.c.l.b16 %v1094
    %v2041 = vunpack.c.h.b16 %v1094
    %v2042 = vunpack.c.l.b16 %v1095
    %v2043 = vunpack.c.h.b16 %v1095
    %v2044 = vunpack.c.l.b16 %v1096
    %v2045 = vunpack.c.h.b16 %v1096
    %v2046 = vunpack.c.l.b16 %v1097
    %v2047 = vunpack.c.h.b16 %v1097
    %v2048 = vunpack.c.l.b16 %v1098
    %v2049 = vunpack.c.h.b16 %v1098
    %v2050 = vunpack.c.l.b16 %v1099
    %v2051 = vunpack.c.h.b16 %v1099
    %v2052 = vunpack.c.l.b16 %v1100
    %v2053 = vunpack.c.h.b16 %v1100
    %v2054 = vunpack.c.l.b16 %v1101
    %v2055 = vunpack.c.h.b16 %v1101
    %v2056 = vunpack.c.l.b16 %v1102
    %v2057 = vunpack.c.h.b16 %v1102
    %v2058 = vunpack.c.l.b16 %v1103
    %v2059 = vunpack.c.h.b16 %v1103
    %v2060 = vunpack.c.l.b16 %v1104
    %v2061 = vunpack.c.h.b16 %v1104
    %v2062 = vunpack.c.l.b16 %v1105
    %v2063 = vunpack.c.h.b16 %v1105
    %v2064 = vunpack.c.l.b16 %v1106
    %v2065 = vunpack.c.h.b16 %v1106
    %v2066 = vunpack.c.l.b16 %v1107
    %v2067 = vunpack.c.h.b16 %v1107
    %v2068 = vunpack.c.l.b16 %v1108
    %v2069 = vunpack.c.h.b16 %v1108
    %v2070 = vunpack.c.l.b16 %v1109
    %v2071 = vunpack.c.h.b16 %v1109
    %v2072 = vunpack.c.l.b16 %v1110
    %v2073 = vunpack.c.h.b16 %v1110
    %v2074 = vunpack.c.l.b16 %v1111
    %v2075 = vunpack.c.h.b16 %v1111
    %v2076 = vunpack.c.l.b16 %v1112
    %v2077 = vunpack.c.h.b16 %v1112
    %v2078 = vunpack.c.l.b16 %v1113
    %v2079 = vunpack.c.h.b16 %v1113
    %v2080 = vunpack.c.l.b16 %v1114
    %v2081 = vunpack.c.h.b16 %v1114
    %v2082 = vunpack.c.l.b16 %v1115
    %v2083 = vunpack.c.h.b16 %v1115
    %v2084 = vunpack.c.l.b16 %v1116
    %v2085 = vunpack.c.h.b16 %v1116
    %v2086 = vunpack.c.l.b16 %v1117
    %v2087 = vunpack.c.h.b16 %v1117
    %v2088 = vunpack.c.l.b16 %v1118
    %v2089 = vunpack.c.h.b16 %v1118
    %v2090 = vunpack.c.l.b16 %v1119
    %v2091 = vunpack.c.h.b16 %v1119
    %v2092 = vunpack.c.l.b16 %v1120
    %v2093 = vunpack.c.h.b16 %v1120
    %v2094 = vunpack.c.l.b16 %v1121
    %v2095 = vunpack.c.h.b16 %v1121
    %v2096 = vunpack.c.l.b16 %v1122
    %v2097 = vunpack.c.h.b16 %v1122
    %v2098 = vunpack.c.l.b16 %v1123
    %v2099 = vunpack.c.h.b16 %v1123
    %v2100 = vunpack.c.l.b16 %v1124
    %v2101 = vunpack.c.h.b16 %v1124
    %v2102 = vunpack.c.l.b16 %v1125
    %v2103 = vunpack.c.h.b16 %v1125
    %v2104 = vunpack.c.l.b16 %v1126
    %v2105 = vunpack.c.h.b16 %v1126
    %v2106 = vunpack.c.l.b16 %v1127
    %v2107 = vunpack.c.h.b16 %v1127
    %v2108 = vunpack.c.l.b16 %v1128
    %v2109 = vunpack.c.h.b16 %v1128
    %v2110 = vunpack.c.l.b16 %v1129
    %v2111 = vunpack.c.h.b16 %v1129
    %v2112 = vunpack.c.l.b16 %v1130
    %v2113 = vunpack.c.h.b16 %v1130
    %v2114 = vunpack.c.l.b16 %v1131
    %v2115 = vunpack.c.h.b16 %v1131
    %v2116 = vunpack.c.l.b16 %v1132
    %v2117 = vunpack.c.h.b16 %v1132
    %v2118 = vunpack.c.l.b16 %v1133
    %v2119 = vunpack.c.h.b16 %v1133
    %v2120 = vunpack.c.l.b16 %v1134
    %v2121 = vunpack.c.h.b16 %v1134
    %v2122 = vunpack.c.l.b16 %v1135
    %v2123 = vunpack.c.h.b16 %v1135
    %v2124 = vunpack.c.l.b16 %v1136
    %v2125 = vunpack.c.h.b16 %v1136
    %v2126 = vunpack.c.l.b16 %v1137
    %v2127 = vunpack.c.h.b16 %v1137
    %v2128 = vunpack.c.l.b16 %v1138
    %v2129 = vunpack.c.h.b16 %v1138
    %v2130 = vunpack.c.l.b16 %v1139
    %v2131 = vunpack.c.h.b16 %v1139
    %v2132 = vunpack.c.l.b16 %v1140
    %v2133 = vunpack.c.h.b16 %v1140
    %v2134 = vunpack.c.l.b16 %v1141
    %v2135 = vunpack.c.h.b16 %v1141
    %v2136 = vunpack.c.l.b16 %v1142
    %v2137 = vunpack.c.h.b16 %v1142
    %v2138 = vunpack.c.l.b16 %v1143
    %v2139 = vunpack.c.h.b16 %v1143
    %v2140 = vunpack.c.l.b16 %v1144
    %v2141 = vunpack.c.h.b16 %v1144
    %v2142 = vunpack.c.l.b16 %v1145
    %v2143 = vunpack.c.h.b16 %v1145
    %v2144 = vunpack.c.l.b16 %v1146
    %v2145 = vunpack.c.h.b16 %v1146
    %v2146 = vunpack.c.l.b16 %v1147
    %v2147 = vunpack.c.h.b16 %v1147
    %v2148 = vunpack.c.l.b16 %v1148
    %v2149 = vunpack.c.h.b16 %v1148
    %v2150 = vunpack.c.l.b16 %v1149
    %v2151 = vunpack.c.h.b16 %v1149
    %v2152 = vunpack.c.l.b16 %v1150
    %v2153 = vunpack.c.h.b16 %v1150
    %v2154 = vunpack.c.l.b16 %v1151
    %v2155 = vunpack.c.h.b16 %v1151
    %v2156 = vunpack.c.l.b16 %v1152
    %v2157 = vunpack.c.h.b16 %v1152
    %v2158 = vunpack.c.l.b16 %v1153
    %v2159 = vunpack.c.h.b16 %v1153
    %v2160 = vunpack.c.l.b16 %v1154
    %v2161 = vunpack.c.h.b16 %v1154
    %v2162 = vunpack.c.l.b16 %v1155
    %v2163 = vunpack.c.h.b16 %v1155
    %v2164 = vunpack.c.l.b16 %v1156
    %v2165 = vunpack.c.h.b16 %v1156
    %v2166 = vunpack.c.l.b16 %v1157
    %v2167 = vunpack.c.h.b16 %v1157
    %v2168 = vunpack.c.l.b16 %v1158
    %v2169 = vunpack.c.h.b16 %v1158
    %v2170 = vunpack.c.l.b16 %v1159
    %v2171 = vunpack.c.h.b16 %v1159
    %v2172 = vunpack.c.l.b16 %v1160
    %v2173 = vunpack.c.h.b16 %v1160
    %v2174 = vunpack.c.l.b16 %v1161
    %v2175 = vunpack.c.h.b16 %v1161
    %v2176 = vpack.c.b16 %v1546, %v1536
    %v2177 = vpack.c.b16 %v1547, %v1537
    %v2178 = vpack.c.b16 %v1548, %v1538
    %v2179 = vpack.c.b16 %v1549, %v1539
    %v2180 = vpack.c.b16 %v1550, %v1540
    %v2181 = vpack.c.b16 %v1551, %v1541
    %v2182 = vpack.c.b16 %v1552, %v1542
    %v2183 = vpack.c.b16 %v1553, %v1543
    %v2184 = vpack.c.b16 %v1554, %v1544
    %v2185 = vpack.c.b16 %v1555, %v1545
    %v2186 = vpack.c.b16 %v1566, %v1556
    %v2187 = vpack.c.b16 %v1567, %v1557
    %v2188 = vpack.c.b16 %v1568, %v1558
    %v2189 = vpack.c.b16 %v1569, %v1559
    %v2190 = vpack.c.b16 %v1570, %v1560
    %v2191 = vpack.c.b16 %v1571, %v1561
    %v2192 = vpack.c.b16 %v1572, %v1562
    %v2193 = vpack.c.b16 %v1573, %v1563
    %v2194 = vpack.c.b16 %v1574, %v1564
    %v2195 = vpack.c.b16 %v1575, %v1565
    %v2196 = vpack.c.b16 %v1586, %v1576
    %v2197 = vpack.c.b16 %v1587, %v1577
    %v2198 = vpack.c.b16 %v1588, %v1578
    %v2199 = vpack.c.b16 %v1589, %v1579
    %v2200 = vpack.c.b16 %v1590, %v1580
    %v2201 = vpack.c.b16 %v1591, %v1581
    %v2202 = vpack.c.b16 %v1592, %v1582
    %v2203 = vpack.c.b16 %v1593, %v1583
    %v2204 = vpack.c.b16 %v1594, %v1584
    %v2205 = vpack.c.b16 %v1595, %v1585
    %v2206 = vpack.c.b16 %v1606, %v1596
    %v2207 = vpack.c.b16 %v1607, %v1597
    %v2208 = vpack.c.b16 %v1608, %v1598
    %v2209 = vpack.c.b16 %v1609, %v1599
    %v2210 = vpack.c.b16 %v1610, %v1600
    %v2211 = vpack.c.b16 %v1611, %v1601
    %v2212 = vpack.c.b16 %v1612, %v1602
    %v2213 = vpack.c.b16 %v1613, %v1603
    %v2214 = vpack.c.b16 %v1614, %v1604
    %v2215 = vpack.c.b16 %v1615, %v1605
    %v2216 = vpack.c.b16 %v1626, %v1616
    %v2217 = vpack.c.b16 %v1627, %v1617
    %v2218 = vpack.c.b16 %v1628, %v1618
    %v2219 = vpack.c.b16 %v1629, %v1619
    %v2220 = vpack.c.b16 %v1630, %v1620
    %v2221 = vpack.c.b16 %v1631, %v1621
    %v2222 = vpack.c.b16 %v1632, %v1622
    %v2223 = vpack.c.b16 %v1633, %v1623
    %v2224 = vpack.c.b16 %v1634, %v1624
    %v2225 = vpack.c.b16 %v1635, %v1625
    %v2226 = vpack.c.b16 %v1646, %v1636
    %v2227 = vpack.c.b16 %v1647, %v1637
    %v2228 = vpack.c.b16 %v1648, %v1638
    %v2229 = vpack.c.b16 %v1649, %v1639
    %v2230 = vpack.c.b16 %v1650, %v1640
    %v2231 = vpack.c.b16 %v1651, %v1641
    %v2232 = vpack.c.b16 %v1652, %v1642
    %v2233 = vpack.c.b16 %v1653, %v1643
    %v2234 = vpack.c.b16 %v1654, %v1644
    %v2235 = vpack.c.b16 %v1655, %v1645
    %v2236 = vpack.c.b16 %v1666, %v1656
    %v2237 = vpack.c.b16 %v1667, %v1657
    %v2238 = vpack.c.b16 %v1668, %v1658
    %v2239 = vpack.c.b16 %v1669, %v1659
    %v2240 = vpack.c.b16 %v1670, %v1660
    %v2241 = vpack.c.b16 %v1671, %v1661
    %v2242 = vpack.c.b16 %v1672, %v1662
    %v2243 = vpack.c.b16 %v1673, %v1663
    %v2244 = vpack.c.b16 %v1674, %v1664
    %v2245 = vpack.c.b16 %v1675, %v1665
    %v2246 = vpack.c.b16 %v1686, %v1676
    %v2247 = vpack.c.b16 %v1687, %v1677
    %v2248 = vpack.c.b16 %v1688, %v1678
    %v2249 = vpack.c.b16 %v1689, %v1679
    %v2250 = vpack.c.b16 %v1690, %v1680
    %v2251 = vpack.c.b16 %v1691, %v1681
    %v2252 = vpack.c.b16 %v1692, %v1682
    %v2253 = vpack.c.b16 %v1693, %v1683
    %v2254 = vpack.c.b16 %v1694, %v1684
    %v2255 = vpack.c.b16 %v1695, %v1685
    %v2256 = vpack.c.b16 %v1706, %v1696
    %v2257 = vpack.c.b16 %v1707, %v1697
    %v2258 = vpack.c.b16 %v1708, %v1698
    %v2259 = vpack.c.b16 %v1709, %v1699
    %v2260 = vpack.c.b16 %v1710, %v1700
    %v2261 = vpack.c.b16 %v1711, %v1701
    %v2262 = vpack.c.b16 %v1712, %v1702
    %v2263 = vpack.c.b16 %v1713, %v1703
    %v2264 = vpack.c.b16 %v1714, %v1704
    %v2265 = vpack.c.b16 %v1715, %v1705
    %v2266 = vpack.c.b16 %v1726, %v1716
    %v2267 = vpack.c.b16 %v1727, %v1717
    %v2268 = vpack.c.b16 %v1728, %v1718
    %v2269 = vpack.c.b16 %v1729, %v1719
    %v2270 = vpack.c.b16 %v1730, %v1720
    %v2271 = vpack.c.b16 %v1731, %v1721
    %v2272 = vpack.c.b16 %v1732, %v1722
    %v2273 = vpack.c.b16 %v1733, %v1723
    %v2274 = vpack.c.b16 %v1734, %v1724
    %v2275 = vpack.c.b16 %v1735, %v1725
    %v2276 = vpack.c.b16 %v1746, %v1736
    %v2277 = vpack.c.b16 %v1747, %v1737
    %v2278 = vpack.c.b16 %v1748, %v1738
    %v2279 = vpack.c.b16 %v1749, %v1739
    %v2280 = vpack.c.b16 %v1750, %v1740
    %v2281 = vpack.c.b16 %v1751, %v1741
    %v2282 = vpack.c.b16 %v1752, %v1742
    %v2283 = vpack.c.b16 %v1753, %v1743
    %v2284 = vpack.c.b16 %v1754, %v1744
    %v2285 = vpack.c.b16 %v1755, %v1745
    %v2286 = vpack.c.b16 %v1766, %v1756
    %v2287 = vpack.c.b16 %v1767, %v1757
    %v2288 = vpack.c.b16 %v1768, %v1758
    %v2289 = vpack.c.b16 %v1769, %v1759
    %v2290 = vpack.c.b16 %v1770, %v1760
    %v2291 = vpack.c.b16 %v1771, %v1761
    %v2292 = vpack.c.b16 %v1772, %v1762
    %v2293 = vpack.c.b16 %v1773, %v1763
    %v2294 = vpack.c.b16 %v1774, %v1764
    %v2295 = vpack.c.b16 %v1775, %v1765
    %v2296 = vpack.c.b16 %v1786, %v1776
    %v2297 = vpack.c.b16 %v1787, %v1777
    %v2298 = vpack.c.b16 %v1788, %v1778
    %v2299 = vpack.c.b16 %v1789, %v1779
    %v2300 = vpack.c.b16 %v1790, %v1780
    %v2301 = vpack.c.b16 %v1791, %v1781
    %v2302 = vpack.c.b16 %v1792, %v1782
    %v2303 = vpack.c.b16 %v1793, %v1783
    %v2304 = vpack.c.b16 %v1794, %v1784
    %v2305 = vpack.c.b16 %v1795, %v1785
    %v2306 = vpack.c.b16 %v1806, %v1796
    %v2307 = vpack.c.b16 %v1807, %v1797
    %v2308 = vpack.c.b16 %v1808, %v1798
    %v2309 = vpack.c.b16 %v1809, %v1799
    %v2310 = vpack.c.b16 %v1810, %v1800
    %v2311 = vpack.c.b16 %v1811, %v1801
    %v2312 = vpack.c.b16 %v1812, %v1802
    %v2313 = vpack.c.b16 %v1813, %v1803
    %v2314 = vpack.c.b16 %v1814, %v1804
    %v2315 = vpack.c.b16 %v1815, %v1805
    %v2316 = vpack.c.b16 %v1826, %v1816
    %v2317 = vpack.c.b16 %v1827, %v1817
    %v2318 = vpack.c.b16 %v1828, %v1818
    %v2319 = vpack.c.b16 %v1829, %v1819
    %v2320 = vpack.c.b16 %v1830, %v1820
    %v2321 = vpack.c.b16 %v1831, %v1821
    %v2322 = vpack.c.b16 %v1832, %v1822
    %v2323 = vpack.c.b16 %v1833, %v1823
    %v2324 = vpack.c.b16 %v1834, %v1824
    %v2325 = vpack.c.b16 %v1835, %v1825
    %v2326 = vpack.c.b16 %v1846, %v1836
    %v2327 = vpack.c.b16 %v1847, %v1837
    %v2328 = vpack.c.b16 %v1848, %v1838
    %v2329 = vpack.c.b16 %v1849, %v1839
    %v2330 = vpack.c.b16 %v1850, %v1840
    %v2331 = vpack.c.b16 %v1851, %v1841
    %v2332 = vpack.c.b16 %v1852, %v1842
    %v2333 = vpack.c.b16 %v1853, %v1843
    %v2334 = vpack.c.b16 %v1854, %v1844
    %v2335 = vpack.c.b16 %v1855, %v1845
    %v2336 = vpack.c.b16 %v1866, %v1856
    %v2337 = vpack.c.b16 %v1867, %v1857
    %v2338 = vpack.c.b16 %v1868, %v1858
    %v2339 = vpack.c.b16 %v1869, %v1859
    %v2340 = vpack.c.b16 %v1870, %v1860
    %v2341 = vpack.c.b16 %v1871, %v1861
    %v2342 = vpack.c.b16 %v1872, %v1862
    %v2343 = vpack.c.b16 %v1873, %v1863
    %v2344 = vpack.c.b16 %v1874, %v1864
    %v2345 = vpack.c.b16 %v1875, %v1865
    %v2346 = vpack.c.b16 %v1886, %v1876
    %v2347 = vpack.c.b16 %v1887, %v1877
    %v2348 = vpack.c.b16 %v1888, %v1878
    %v2349 = vpack.c.b16 %v1889, %v1879
    %v2350 = vpack.c.b16 %v1890, %v1880
    %v2351 = vpack.c.b16 %v1891, %v1881
    %v2352 = vpack.c.b16 %v1892, %v1882
    %v2353 = vpack.c.b16 %v1893, %v1883
    %v2354 = vpack.c.b16 %v1894, %v1884
    %v2355 = vpack.c.b16 %v1895, %v1885
    %v2356 = vpack.c.b16 %v1906, %v1896
    %v2357 = vpack.c.b16 %v1907, %v1897
    %v2358 = vpack.c.b16 %v1908, %v1898
    %v2359 = vpack.c.b16 %v1909, %v1899
    %v2360 = vpack.c.b16 %v1910, %v1900
    %v2361 = vpack.c.b16 %v1911, %v1901
    %v2362 = vpack.c.b16 %v1912, %v1902
    %v2363 = vpack.c.b16 %v1913, %v1903
    %v2364 = vpack.c.b16 %v1914, %v1904
    %v2365 = vpack.c.b16 %v1915, %v1905
    %v2366 = vpack.c.b16 %v1926, %v1916
    %v2367 = vpack.c.b16 %v1927, %v1917
    %v2368 = vpack.c.b16 %v1928, %v1918
    %v2369 = vpack.c.b16 %v1929, %v1919
    %v2370 = vpack.c.b16 %v1930, %v1920
    %v2371 = vpack.c.b16 %v1931, %v1921
    %v2372 = vpack.c.b16 %v1932, %v1922
    %v2373 = vpack.c.b16 %v1933, %v1923
    %v2374 = vpack.c.b16 %v1934, %v1924
    %v2375 = vpack.c.b16 %v1935, %v1925
    %v2376 = vpack.c.b16 %v1946, %v1936
    %v2377 = vpack.c.b16 %v1947, %v1937
    %v2378 = vpack.c.b16 %v1948, %v1938
    %v2379 = vpack.c.b16 %v1949, %v1939
    %v2380 = vpack.c.b16 %v1950, %v1940
    %v2381 = vpack.c.b16 %v1951, %v1941
    %v2382 = vpack.c.b16 %v1952, %v1942
    %v2383 = vpack.c.b16 %v1953, %v1943
    %v2384 = vpack.c.b16 %v1954, %v1944
    %v2385 = vpack.c.b16 %v1955, %v1945
    %v2386 = vpack.c.b16 %v1966, %v1956
    %v2387 = vpack.c.b16 %v1967, %v1957
    %v2388 = vpack.c.b16 %v1968, %v1958
    %v2389 = vpack.c.b16 %v1969, %v1959
    %v2390 = vpack.c.b16 %v1970, %v1960
    %v2391 = vpack.c.b16 %v1971, %v1961
    %v2392 = vpack.c.b16 %v1972, %v1962
    %v2393 = vpack.c.b16 %v1973, %v1963
    %v2394 = vpack.c.b16 %v1974, %v1964
    %v2395 = vpack.c.b16 %v1975, %v1965
    %v2396 = vpack.c.b16 %v1986, %v1976
    %v2397 = vpack.c.b16 %v1987, %v1977
    %v2398 = vpack.c.b16 %v1988, %v1978
    %v2399 = vpack.c.b16 %v1989, %v1979
    %v2400 = vpack.c.b16 %v1990, %v1980
    %v2401 = vpack.c.b16 %v1991, %v1981
    %v2402 = vpack.c.b16 %v1992, %v1982
    %v2403 = vpack.c.b16 %v1993, %v1983
    %v2404 = vpack.c.b16 %v1994, %v1984
    %v2405 = vpack.c.b16 %v1995, %v1985
    %v2406 = vpack.c.b16 %v2006, %v1996
    %v2407 = vpack.c.b16 %v2007, %v1997
    %v2408 = vpack.c.b16 %v2008, %v1998
    %v2409 = vpack.c.b16 %v2009, %v1999
    %v2410 = vpack.c.b16 %v2010, %v2000
    %v2411 = vpack.c.b16 %v2011, %v2001
    %v2412 = vpack.c.b16 %v2012, %v2002
    %v2413 = vpack.c.b16 %v2013, %v2003
    %v2414 = vpack.c.b16 %v2014, %v2004
    %v2415 = vpack.c.b16 %v2015, %v2005
    %v2416 = vpack.c.b16 %v2026, %v2016
    %v2417 = vpack.c.b16 %v2027, %v2017
    %v2418 = vpack.c.b16 %v2028, %v2018
    %v2419 = vpack.c.b16 %v2029, %v2019
    %v2420 = vpack.c.b16 %v2030, %v2020
    %v2421 = vpack.c.b16 %v2031, %v2021
    %v2422 = vpack.c.b16 %v2032, %v2022
    %v2423 = vpack.c.b16 %v2033, %v2023
    %v2424 = vpack.c.b16 %v2034, %v2024
    %v2425 = vpack.c.b16 %v2035, %v2025
    %v2426 = vpack.c.b16 %v2046, %v2036
    %v2427 = vpack.c.b16 %v2047, %v2037
    %v2428 = vpack.c.b16 %v2048, %v2038
    %v2429 = vpack.c.b16 %v2049, %v2039
    %v2430 = vpack.c.b16 %v2050, %v2040
    %v2431 = vpack.c.b16 %v2051, %v2041
    %v2432 = vpack.c.b16 %v2052, %v2042
    %v2433 = vpack.c.b16 %v2053, %v2043
    %v2434 = vpack.c.b16 %v2054, %v2044
    %v2435 = vpack.c.b16 %v2055, %v2045
    %v2436 = vpack.c.b16 %v2066, %v2056
    %v2437 = vpack.c.b16 %v2067, %v2057
    %v2438 = vpack.c.b16 %v2068, %v2058
    %v2439 = vpack.c.b16 %v2069, %v2059
    %v2440 = vpack.c.b16 %v2070, %v2060
    %v2441 = vpack.c.b16 %v2071, %v2061
    %v2442 = vpack.c.b16 %v2072, %v2062
    %v2443 = vpack.c.b16 %v2073, %v2063
    %v2444 = vpack.c.b16 %v2074, %v2064
    %v2445 = vpack.c.b16 %v2075, %v2065
    %v2446 = vpack.c.b16 %v2086, %v2076
    %v2447 = vpack.c.b16 %v2087, %v2077
    %v2448 = vpack.c.b16 %v2088, %v2078
    %v2449 = vpack.c.b16 %v2089, %v2079
    %v2450 = vpack.c.b16 %v2090, %v2080
    %v2451 = vpack.c.b16 %v2091, %v2081
    %v2452 = vpack.c.b16 %v2092, %v2082
    %v2453 = vpack.c.b16 %v2093, %v2083
    %v2454 = vpack.c.b16 %v2094, %v2084
    %v2455 = vpack.c.b16 %v2095, %v2085
    %v2456 = vpack.c.b16 %v2106, %v2096
    %v2457 = vpack.c.b16 %v2107, %v2097
    %v2458 = vpack.c.b16 %v2108, %v2098
    %v2459 = vpack.c.b16 %v2109, %v2099
    %v2460 = vpack.c.b16 %v2110, %v2100
    %v2461 = vpack.c.b16 %v2111, %v2101
    %v2462 = vpack.c.b16 %v2112, %v2102
    %v2463 = vpack.c.b16 %v2113, %v2103
    %v2464 = vpack.c.b16 %v2114, %v2104
    %v2465 = vpack.c.b16 %v2115, %v2105
    %v2466 = vpack.c.b16 %v2126, %v2116
    %v2467 = vpack.c.b16 %v2127, %v2117
    %v2468 = vpack.c.b16 %v2128, %v2118
    %v2469 = vpack.c.b16 %v2129, %v2119
    %v2470 = vpack.c.b16 %v2130, %v2120
    %v2471 = vpack.c.b16 %v2131, %v2121
    %v2472 = vpack.c.b16 %v2132, %v2122
    %v2473 = vpack.c.b16 %v2133, %v2123
    %v2474 = vpack.c.b16 %v2134, %v2124
    %v2475 = vpack.c.b16 %v2135, %v2125
    %v2476 = vpack.c.b16 %v2146, %v2136
    %v2477 = vpack.c.b16 %v2147, %v2137
    %v2478 = vpack.c.b16 %v2148, %v2138
    %v2479 = vpack.c.b16 %v2149, %v2139
    %v2480 = vpack.c.b16 %v2150, %v2140
    %v2481 = vpack.c.b16 %v2151, %v2141
    %v2482 = vpack.c.b16 %v2152, %v2142
    %v2483 = vpack.c.b16 %v2153, %v2143
    %v2484 = vpack.c.b16 %v2154, %v2144
    %v2485 = vpack.c.b16 %v2155, %v2145
    %v2486 = vpack.c.b16 %v2166, %v2156
    %v2487 = vpack.c.b16 %v2167, %v2157
    %v2488 = vpack.c.b16 %v2168, %v2158
    %v2489 = vpack.c.b16 %v2169, %v2159
    %v2490 = vpack.c.b16 %v2170, %v2160
    %v2491 = vpack.c.b16 %v2171, %v2161
    %v2492 = vpack.c.b16 %v2172, %v2162
    %v2493 = vpack.c.b16 %v2173, %v2163
    %v2494 = vpack.c.b16 %v2174, %v2164
    %v2495 = vpack.c.b16 %v2175, %v2165
    %2816 = vmatprep.subr.bf16.mxu0 %v2177
    %2817 = vmatpush1.bf16.msra.mxu0 %v2176
    %2818 = vmatprep.subr.bf16.mxu0 %v2187
    %2819 = vmatpush1.bf16.msra.mxu0 %v2186
    %2820 = vmatprep.subr.bf16.mxu0 %v2197
    %2821 = vmatpush1.bf16.msra.mxu0 %v2196
    %2822 = vmatprep.subr.bf16.mxu0 %v2207
    %2823 = vmatpush1.bf16.msra.mxu0 %v2206
    %2824 = vmatprep.subr.bf16.mxu0 %v2217
    %2825 = vmatpush1.bf16.msra.mxu0 %v2216
    %2826 = vmatprep.subr.bf16.mxu0 %v2227
    %2827 = vmatpush1.bf16.msra.mxu0 %v2226
    %2828 = vmatprep.subr.bf16.mxu0 %v2237
    %2829 = vmatpush1.bf16.msra.mxu0 %v2236
    %2830 = vmatprep.subr.bf16.mxu0 %v2247
    %2831 = vmatpush1.bf16.msra.mxu0 %v2246
    %2832 = vmatprep.subr.bf16.mxu0 %v2257
    %2833 = vmatpush1.bf16.msra.mxu0 %v2256
    %2834 = vmatprep.subr.bf16.mxu0 %v2267
    %2835 = vmatpush1.bf16.msra.mxu0 %v2266
    %2836 = vmatprep.subr.bf16.mxu0 %v2277
    %2837 = vmatpush1.bf16.msra.mxu0 %v2276
    %2838 = vmatprep.subr.bf16.mxu0 %v2287
    %2839 = vmatpush1.bf16.msra.mxu0 %v2286
    %2840 = vmatprep.subr.bf16.mxu0 %v2297
    %2841 = vmatpush1.bf16.msra.mxu0 %v2296
    %2842 = vmatprep.subr.bf16.mxu0 %v2307
    %2843 = vmatpush1.bf16.msra.mxu0 %v2306
    %2844 = vmatprep.subr.bf16.mxu0 %v2317
    %2845 = vmatpush1.bf16.msra.mxu0 %v2316
    %2846 = vmatprep.subr.bf16.mxu0 %v2327
    %2847 = vmatpush1.bf16.msra.mxu0 %v2326
    %2848 = vmatprep.mubr.bf16.mxu0 %v839
    %2849 = vmatmul.mubr.bf16.gmra.mrb[0].mxu0 %v838
    %v2850 = vpop.f32.mrb[0].mxu0
    %v2851 = vadd.f32 %v1169, %v2850
    %v2852 = vpop.f32.mrb[0].mxu0
    %v2853 = vadd.f32 %v1173, %v2852
    %v2854 = vpop.f32.mrb[0].mxu0
    %v2855 = vpop.f32.mrb[0].mxu0
    %2856 = vdwg.mxu0
    %2857 = vmatprep.subr.bf16.mxu0 %v2337
    %2858 = vmatpush1.bf16.msra.mxu0 %v2336
    %2859 = vmatprep.subr.bf16.mxu0 %v2347
    %2860 = vmatpush1.bf16.msra.mxu0 %v2346
    %2861 = vmatprep.subr.bf16.mxu0 %v2357
    %2862 = vmatpush1.bf16.msra.mxu0 %v2356
    %2863 = vmatprep.subr.bf16.mxu0 %v2367
    %2864 = vmatpush1.bf16.msra.mxu0 %v2366
    %2865 = vmatprep.subr.bf16.mxu0 %v2377
    %2866 = vmatpush1.bf16.msra.mxu0 %v2376
    %2867 = vmatprep.subr.bf16.mxu0 %v2387
    %2868 = vmatpush1.bf16.msra.mxu0 %v2386
    %2869 = vmatprep.subr.bf16.mxu0 %v2397
    %2870 = vmatpush1.bf16.msra.mxu0 %v2396
    %2871 = vmatprep.subr.bf16.mxu0 %v2407
    %2872 = vmatpush1.bf16.msra.mxu0 %v2406
    %2873 = vmatprep.subr.bf16.mxu0 %v2417
    %2874 = vmatpush1.bf16.msra.mxu0 %v2416
    %2875 = vmatprep.subr.bf16.mxu0 %v2427
    %2876 = vmatpush1.bf16.msra.mxu0 %v2426
    %2877 = vmatprep.subr.bf16.mxu0 %v2437
    %2878 = vmatpush1.bf16.msra.mxu0 %v2436
    %2879 = vmatprep.subr.bf16.mxu0 %v2447
    %2880 = vmatpush1.bf16.msra.mxu0 %v2446
    %2881 = vmatprep.subr.bf16.mxu0 %v2457
    %2882 = vmatpush1.bf16.msra.mxu0 %v2456
    %2883 = vmatprep.subr.bf16.mxu0 %v2467
    %2884 = vmatpush1.bf16.msra.mxu0 %v2466
    %2885 = vmatprep.subr.bf16.mxu0 %v2477
    %2886 = vmatpush1.bf16.msra.mxu0 %v2476
    %2887 = vmatprep.subr.bf16.mxu0 %v2487
    %2888 = vmatpush1.bf16.msra.mxu0 %v2486
    %2889 = vmatprep.mubr.bf16.mxu0 %v841
    %2890 = vmatmul.mubr.bf16.gmra.mrb[0].mxu0 %v840
    %v2891 = vpop.f32.mrb[0].mxu0
    %v2892 = vadd.f32 %v2851, %v2891
    %v2893 = vpop.f32.mrb[0].mxu0
    %v2894 = vadd.f32 %v2853, %v2893
    %v2895 = vpop.f32.mrb[0].mxu0
    %v2896 = vpop.f32.mrb[0].mxu0
    %2897 = vdwg.mxu0
    %2898 = vmatprep.subr.bf16.mxu0 %v2179
    %2899 = vmatpush1.bf16.msra.mxu0 %v2178
    %2900 = vmatprep.subr.bf16.mxu0 %v2189
    %2901 = vmatpush1.bf16.msra.mxu0 %v2188
    %2902 = vmatprep.subr.bf16.mxu0 %v2199
    %2903 = vmatpush1.bf16.msra.mxu0 %v2198
    %2904 = vmatprep.subr.bf16.mxu0 %v2209
    %2905 = vmatpush1.bf16.msra.mxu0 %v2208
    %2906 = vmatprep.subr.bf16.mxu0 %v2219
    %2907 = vmatpush1.bf16.msra.mxu0 %v2218
    %2908 = vmatprep.subr.bf16.mxu0 %v2229
    %2909 = vmatpush1.bf16.msra.mxu0 %v2228
    %2910 = vmatprep.subr.bf16.mxu0 %v2239
    %2911 = vmatpush1.bf16.msra.mxu0 %v2238
    %2912 = vmatprep.subr.bf16.mxu0 %v2249
    %2913 = vmatpush1.bf16.msra.mxu0 %v2248
    %2914 = vmatprep.subr.bf16.mxu0 %v2259
    %2915 = vmatpush1.bf16.msra.mxu0 %v2258
    %2916 = vmatprep.subr.bf16.mxu0 %v2269
    %2917 = vmatpush1.bf16.msra.mxu0 %v2268
    %2918 = vmatprep.subr.bf16.mxu0 %v2279
    %2919 = vmatpush1.bf16.msra.mxu0 %v2278
    %2920 = vmatprep.subr.bf16.mxu0 %v2289
    %2921 = vmatpush1.bf16.msra.mxu0 %v2288
    %2922 = vmatprep.subr.bf16.mxu0 %v2299
    %2923 = vmatpush1.bf16.msra.mxu0 %v2298
    %2924 = vmatprep.subr.bf16.mxu0 %v2309
    %2925 = vmatpush1.bf16.msra.mxu0 %v2308
    %2926 = vmatprep.subr.bf16.mxu0 %v2319
    %2927 = vmatpush1.bf16.msra.mxu0 %v2318
    %2928 = vmatprep.subr.bf16.mxu0 %v2329
    %2929 = vmatpush1.bf16.msra.mxu0 %v2328
    %2930 = vmatprep.mubr.bf16.mxu0 %v839
    %2931 = vmatmul.mubr.bf16.gmra.mrb[0].mxu0 %v838
    %v2932 = vpop.f32.mrb[0].mxu0
    %v2933 = vadd.f32 %v1177, %v2932
    %v2934 = vpop.f32.mrb[0].mxu0
    %v2935 = vadd.f32 %v1181, %v2934
    %v2936 = vpop.f32.mrb[0].mxu0
    %v2937 = vpop.f32.mrb[0].mxu0
    %2938 = vdwg.mxu0
    %2939 = vmatprep.subr.bf16.mxu0 %v2339
    %2940 = vmatpush1.bf16.msra.mxu0 %v2338
    %2941 = vmatprep.subr.bf16.mxu0 %v2349
    %2942 = vmatpush1.bf16.msra.mxu0 %v2348
    %2943 = vmatprep.subr.bf16.mxu0 %v2359
    %2944 = vmatpush1.bf16.msra.mxu0 %v2358
    %2945 = vmatprep.subr.bf16.mxu0 %v2369
    %2946 = vmatpush1.bf16.msra.mxu0 %v2368
    %2947 = vmatprep.subr.bf16.mxu0 %v2379
    %2948 = vmatpush1.bf16.msra.mxu0 %v2378
    %2949 = vmatprep.subr.bf16.mxu0 %v2389
    %2950 = vmatpush1.bf16.msra.mxu0 %v2388
    %2951 = vmatprep.subr.bf16.mxu0 %v2399
    %2952 = vmatpush1.bf16.msra.mxu0 %v2398
    %2953 = vmatprep.subr.bf16.mxu0 %v2409
    %2954 = vmatpush1.bf16.msra.mxu0 %v2408
    %2955 = vmatprep.subr.bf16.mxu0 %v2419
    %2956 = vmatpush1.bf16.msra.mxu0 %v2418
    %2957 = vmatprep.subr.bf16.mxu0 %v2429
    %2958 = vmatpush1.bf16.msra.mxu0 %v2428
    %2959 = vmatprep.subr.bf16.mxu0 %v2439
    %2960 = vmatpush1.bf16.msra.mxu0 %v2438
    %2961 = vmatprep.subr.bf16.mxu0 %v2449
    %2962 = vmatpush1.bf16.msra.mxu0 %v2448
    %2963 = vmatprep.subr.bf16.mxu0 %v2459
    %2964 = vmatpush1.bf16.msra.mxu0 %v2458
    %2965 = vmatprep.subr.bf16.mxu0 %v2469
    %2966 = vmatpush1.bf16.msra.mxu0 %v2468
    %2967 = vmatprep.subr.bf16.mxu0 %v2479
    %2968 = vmatpush1.bf16.msra.mxu0 %v2478
    %2969 = vmatprep.subr.bf16.mxu0 %v2489
    %2970 = vmatpush1.bf16.msra.mxu0 %v2488
    %2971 = vmatprep.mubr.bf16.mxu0 %v841
    %2972 = vmatmul.mubr.bf16.gmra.mrb[0].mxu0 %v840
    %v2973 = vpop.f32.mrb[0].mxu0
    %v2974 = vadd.f32 %v2933, %v2973
    %v2975 = vpop.f32.mrb[0].mxu0
    %v2976 = vadd.f32 %v2935, %v2975
    %v2977 = vpop.f32.mrb[0].mxu0
    %v2978 = vpop.f32.mrb[0].mxu0
    %2979 = vdwg.mxu0
    %2980 = vmatprep.subr.bf16.mxu0 %v2181
    %2981 = vmatpush1.bf16.msra.mxu0 %v2180
    %2982 = vmatprep.subr.bf16.mxu0 %v2191
    %2983 = vmatpush1.bf16.msra.mxu0 %v2190
    %2984 = vmatprep.subr.bf16.mxu0 %v2201
    %2985 = vmatpush1.bf16.msra.mxu0 %v2200
    %2986 = vmatprep.subr.bf16.mxu0 %v2211
    %2987 = vmatpush1.bf16.msra.mxu0 %v2210
    %2988 = vmatprep.subr.bf16.mxu0 %v2221
    %2989 = vmatpush1.bf16.msra.mxu0 %v2220
    %2990 = vmatprep.subr.bf16.mxu0 %v2231
    %2991 = vmatpush1.bf16.msra.mxu0 %v2230
    %2992 = vmatprep.subr.bf16.mxu0 %v2241
    %2993 = vmatpush1.bf16.msra.mxu0 %v2240
    %2994 = vmatprep.subr.bf16.mxu0 %v2251
    %2995 = vmatpush1.bf16.msra.mxu0 %v2250
    %2996 = vmatprep.subr.bf16.mxu0 %v2261
    %2997 = vmatpush1.bf16.msra.mxu0 %v2260
    %2998 = vmatprep.subr.bf16.mxu0 %v2271
    %2999 = vmatpush1.bf16.msra.mxu0 %v2270
    %3000 = vmatprep.subr.bf16.mxu0 %v2281
    %3001 = vmatpush1.bf16.msra.mxu0 %v2280
    %3002 = vmatprep.subr.bf16.mxu0 %v2291
    %3003 = vmatpush1.bf16.msra.mxu0 %v2290
    %3004 = vmatprep.subr.bf16.mxu0 %v2301
    %3005 = vmatpush1.bf16.msra.mxu0 %v2300
    %3006 = vmatprep.subr.bf16.mxu0 %v2311
    %3007 = vmatpush1.bf16.msra.mxu0 %v2310
    %3008 = vmatprep.subr.bf16.mxu0 %v2321
    %3009 = vmatpush1.bf16.msra.mxu0 %v2320
    %3010 = vmatprep.subr.bf16.mxu0 %v2331
    %3011 = vmatpush1.bf16.msra.mxu0 %v2330
    %3012 = vmatprep.mubr.bf16.mxu0 %v839
    %3013 = vmatmul.mubr.bf16.gmra.mrb[0].mxu0 %v838
    %v3014 = vpop.f32.mrb[0].mxu0
    %v3015 = vadd.f32 %v1185, %v3014
    %v3016 = vpop.f32.mrb[0].mxu0
    %v3017 = vadd.f32 %v1189, %v3016
    %v3018 = vpop.f32.mrb[0].mxu0
    %v3019 = vpop.f32.mrb[0].mxu0
    %3020 = vdwg.mxu0
    %3021 = vmatprep.subr.bf16.mxu0 %v2341
    %3022 = vmatpush1.bf16.msra.mxu0 %v2340
    %3023 = vmatprep.subr.bf16.mxu0 %v2351
    %3024 = vmatpush1.bf16.msra.mxu0 %v2350
    %3025 = vmatprep.subr.bf16.mxu0 %v2361
    %3026 = vmatpush1.bf16.msra.mxu0 %v2360
    %3027 = vmatprep.subr.bf16.mxu0 %v2371
    %3028 = vmatpush1.bf16.msra.mxu0 %v2370
    %3029 = vmatprep.subr.bf16.mxu0 %v2381
    %3030 = vmatpush1.bf16.msra.mxu0 %v2380
    %3031 = vmatprep.subr.bf16.mxu0 %v2391
    %3032 = vmatpush1.bf16.msra.mxu0 %v2390
    %3033 = vmatprep.subr.bf16.mxu0 %v2401
    %3034 = vmatpush1.bf16.msra.mxu0 %v2400
    %3035 = vmatprep.subr.bf16.mxu0 %v2411
    %3036 = vmatpush1.bf16.msra.mxu0 %v2410
    %3037 = vmatprep.subr.bf16.mxu0 %v2421
    %3038 = vmatpush1.bf16.msra.mxu0 %v2420
    %3039 = vmatprep.subr.bf16.mxu0 %v2431
    %3040 = vmatpush1.bf16.msra.mxu0 %v2430
    %3041 = vmatprep.subr.bf16.mxu0 %v2441
    %3042 = vmatpush1.bf16.msra.mxu0 %v2440
    %3043 = vmatprep.subr.bf16.mxu0 %v2451
    %3044 = vmatpush1.bf16.msra.mxu0 %v2450
    %3045 = vmatprep.subr.bf16.mxu0 %v2461
    %3046 = vmatpush1.bf16.msra.mxu0 %v2460
    %3047 = vmatprep.subr.bf16.mxu0 %v2471
    %3048 = vmatpush1.bf16.msra.mxu0 %v2470
    %3049 = vmatprep.subr.bf16.mxu0 %v2481
    %3050 = vmatpush1.bf16.msra.mxu0 %v2480
    %3051 = vmatprep.subr.bf16.mxu0 %v2491
    %3052 = vmatpush1.bf16.msra.mxu0 %v2490
    %3053 = vmatprep.mubr.bf16.mxu0 %v841
    %3054 = vmatmul.mubr.bf16.gmra.mrb[0].mxu0 %v840
    %v3055 = vpop.f32.mrb[0].mxu0
    %v3056 = vadd.f32 %v3015, %v3055
    %v3057 = vpop.f32.mrb[0].mxu0
    %v3058 = vadd.f32 %v3017, %v3057
    %v3059 = vpop.f32.mrb[0].mxu0
    %v3060 = vpop.f32.mrb[0].mxu0
    %3061 = vdwg.mxu0
    %3062 = vmatprep.subr.bf16.mxu0 %v2183
    %3063 = vmatpush1.bf16.msra.mxu0 %v2182
    %3064 = vmatprep.subr.bf16.mxu0 %v2193
    %3065 = vmatpush1.bf16.msra.mxu0 %v2192
    %3066 = vmatprep.subr.bf16.mxu0 %v2203
    %3067 = vmatpush1.bf16.msra.mxu0 %v2202
    %3068 = vmatprep.subr.bf16.mxu0 %v2213
    %3069 = vmatpush1.bf16.msra.mxu0 %v2212
    %3070 = vmatprep.subr.bf16.mxu0 %v2223
    %3071 = vmatpush1.bf16.msra.mxu0 %v2222
    %3072 = vmatprep.subr.bf16.mxu0 %v2233
    %3073 = vmatpush1.bf16.msra.mxu0 %v2232
    %3074 = vmatprep.subr.bf16.mxu0 %v2243
    %3075 = vmatpush1.bf16.msra.mxu0 %v2242
    %3076 = vmatprep.subr.bf16.mxu0 %v2253
    %3077 = vmatpush1.bf16.msra.mxu0 %v2252
    %3078 = vmatprep.subr.bf16.mxu0 %v2263
    %3079 = vmatpush1.bf16.msra.mxu0 %v2262
    %3080 = vmatprep.subr.bf16.mxu0 %v2273
    %3081 = vmatpush1.bf16.msra.mxu0 %v2272
    %3082 = vmatprep.subr.bf16.mxu0 %v2283
    %3083 = vmatpush1.bf16.msra.mxu0 %v2282
    %3084 = vmatprep.subr.bf16.mxu0 %v2293
    %3085 = vmatpush1.bf16.msra.mxu0 %v2292
    %3086 = vmatprep.subr.bf16.mxu0 %v2303
    %3087 = vmatpush1.bf16.msra.mxu0 %v2302
    %3088 = vmatprep.subr.bf16.mxu0 %v2313
    %3089 = vmatpush1.bf16.msra.mxu0 %v2312
    %3090 = vmatprep.subr.bf16.mxu0 %v2323
    %3091 = vmatpush1.bf16.msra.mxu0 %v2322
    %3092 = vmatprep.subr.bf16.mxu0 %v2333
    %3093 = vmatpush1.bf16.msra.mxu0 %v2332
    %3094 = vmatprep.mubr.bf16.mxu0 %v839
    %3095 = vmatmul.mubr.bf16.gmra.mrb[0].mxu0 %v838
    %v3096 = vpop.f32.mrb[0].mxu0
    %v3097 = vadd.f32 %v1193, %v3096
    %v3098 = vpop.f32.mrb[0].mxu0
    %v3099 = vadd.f32 %v1197, %v3098
    %v3100 = vpop.f32.mrb[0].mxu0
    %v3101 = vpop.f32.mrb[0].mxu0
    %3102 = vdwg.mxu0
    %3103 = vmatprep.subr.bf16.mxu0 %v2343
    %3104 = vmatpush1.bf16.msra.mxu0 %v2342
    %3105 = vmatprep.subr.bf16.mxu0 %v2353
    %3106 = vmatpush1.bf16.msra.mxu0 %v2352
    %3107 = vmatprep.subr.bf16.mxu0 %v2363
    %3108 = vmatpush1.bf16.msra.mxu0 %v2362
    %3109 = vmatprep.subr.bf16.mxu0 %v2373
    %3110 = vmatpush1.bf16.msra.mxu0 %v2372
    %3111 = vmatprep.subr.bf16.mxu0 %v2383
    %3112 = vmatpush1.bf16.msra.mxu0 %v2382
    %3113 = vmatprep.subr.bf16.mxu0 %v2393
    %3114 = vmatpush1.bf16.msra.mxu0 %v2392
    %3115 = vmatprep.subr.bf16.mxu0 %v2403
    %3116 = vmatpush1.bf16.msra.mxu0 %v2402
    %3117 = vmatprep.subr.bf16.mxu0 %v2413
    %3118 = vmatpush1.bf16.msra.mxu0 %v2412
    %3119 = vmatprep.subr.bf16.mxu0 %v2423
    %3120 = vmatpush1.bf16.msra.mxu0 %v2422
    %3121 = vmatprep.subr.bf16.mxu0 %v2433
    %3122 = vmatpush1.bf16.msra.mxu0 %v2432
    %3123 = vmatprep.subr.bf16.mxu0 %v2443
    %3124 = vmatpush1.bf16.msra.mxu0 %v2442
    %3125 = vmatprep.subr.bf16.mxu0 %v2453
    %3126 = vmatpush1.bf16.msra.mxu0 %v2452
    %3127 = vmatprep.subr.bf16.mxu0 %v2463
    %3128 = vmatpush1.bf16.msra.mxu0 %v2462
    %3129 = vmatprep.subr.bf16.mxu0 %v2473
    %3130 = vmatpush1.bf16.msra.mxu0 %v2472
    %3131 = vmatprep.subr.bf16.mxu0 %v2483
    %3132 = vmatpush1.bf16.msra.mxu0 %v2482
    %3133 = vmatprep.subr.bf16.mxu0 %v2493
    %3134 = vmatpush1.bf16.msra.mxu0 %v2492
    %3135 = vmatprep.mubr.bf16.mxu0 %v841
    %3136 = vmatmul.mubr.bf16.gmra.mrb[0].mxu0 %v840
    %v3137 = vpop.f32.mrb[0].mxu0
    %v3138 = vadd.f32 %v3097, %v3137
    %v3139 = vpop.f32.mrb[0].mxu0
    %v3140 = vadd.f32 %v3099, %v3139
    %v3141 = vpop.f32.mrb[0].mxu0
    %v3142 = vpop.f32.mrb[0].mxu0
    %3143 = vdwg.mxu0
    %3144 = vmatprep.subr.bf16.mxu0 %v2185
    %3145 = vmatpush1.bf16.msra.mxu0 %v2184
    %3146 = vmatprep.subr.bf16.mxu0 %v2195
    %3147 = vmatpush1.bf16.msra.mxu0 %v2194
    %3148 = vmatprep.subr.bf16.mxu0 %v2205
    %3149 = vmatpush1.bf16.msra.mxu0 %v2204
    %3150 = vmatprep.subr.bf16.mxu0 %v2215
    %3151 = vmatpush1.bf16.msra.mxu0 %v2214
    %3152 = vmatprep.subr.bf16.mxu0 %v2225
    %3153 = vmatpush1.bf16.msra.mxu0 %v2224
    %3154 = vmatprep.subr.bf16.mxu0 %v2235
    %3155 = vmatpush1.bf16.msra.mxu0 %v2234
    %3156 = vmatprep.subr.bf16.mxu0 %v2245
    %3157 = vmatpush1.bf16.msra.mxu0 %v2244
    %3158 = vmatprep.subr.bf16.mxu0 %v2255
    %3159 = vmatpush1.bf16.msra.mxu0 %v2254
    %3160 = vmatprep.subr.bf16.mxu0 %v2265
    %3161 = vmatpush1.bf16.msra.mxu0 %v2264
    %3162 = vmatprep.subr.bf16.mxu0 %v2275
    %3163 = vmatpush1.bf16.msra.mxu0 %v2274
    %3164 = vmatprep.subr.bf16.mxu0 %v2285
    %3165 = vmatpush1.bf16.msra.mxu0 %v2284
    %3166 = vmatprep.subr.bf16.mxu0 %v2295
    %3167 = vmatpush1.bf16.msra.mxu0 %v2294
    %3168 = vmatprep.subr.bf16.mxu0 %v2305
    %3169 = vmatpush1.bf16.msra.mxu0 %v2304
    %3170 = vmatprep.subr.bf16.mxu0 %v2315
    %3171 = vmatpush1.bf16.msra.mxu0 %v2314
    %3172 = vmatprep.subr.bf16.mxu0 %v2325
    %3173 = vmatpush1.bf16.msra.mxu0 %v2324
    %3174 = vmatprep.subr.bf16.mxu0 %v2335
    %3175 = vmatpush1.bf16.msra.mxu0 %v2334
    %3176 = vmatprep.mubr.bf16.mxu0 %v839
    %3177 = vmatmul.mubr.bf16.gmra.mrb[0].mxu0 %v838
    %v3178 = vpop.f32.mrb[0].mxu0
    %v3179 = vadd.f32 %v1201, %v3178
    %v3180 = vpop.f32.mrb[0].mxu0
    %v3181 = vadd.f32 %v1205, %v3180
    %v3182 = vpop.f32.mrb[0].mxu0
    %v3183 = vpop.f32.mrb[0].mxu0
    %3184 = vdwg.mxu0
    %3185 = vmatprep.subr.bf16.mxu0 %v2345
    %3186 = vmatpush1.bf16.msra.mxu0 %v2344
    %3187 = vmatprep.subr.bf16.mxu0 %v2355
    %3188 = vmatpush1.bf16.msra.mxu0 %v2354
    %3189 = vmatprep.subr.bf16.mxu0 %v2365
    %3190 = vmatpush1.bf16.msra.mxu0 %v2364
    %3191 = vmatprep.subr.bf16.mxu0 %v2375
    %3192 = vmatpush1.bf16.msra.mxu0 %v2374
    %3193 = vmatprep.subr.bf16.mxu0 %v2385
    %3194 = vmatpush1.bf16.msra.mxu0 %v2384
    %3195 = vmatprep.subr.bf16.mxu0 %v2395
    %3196 = vmatpush1.bf16.msra.mxu0 %v2394
    %3197 = vmatprep.subr.bf16.mxu0 %v2405
    %3198 = vmatpush1.bf16.msra.mxu0 %v2404
    %3199 = vmatprep.subr.bf16.mxu0 %v2415
    %3200 = vmatpush1.bf16.msra.mxu0 %v2414
    %3201 = vmatprep.subr.bf16.mxu0 %v2425
    %3202 = vmatpush1.bf16.msra.mxu0 %v2424
    %3203 = vmatprep.subr.bf16.mxu0 %v2435
    %3204 = vmatpush1.bf16.msra.mxu0 %v2434
    %3205 = vmatprep.subr.bf16.mxu0 %v2445
    %3206 = vmatpush1.bf16.msra.mxu0 %v2444
    %3207 = vmatprep.subr.bf16.mxu0 %v2455
    %3208 = vmatpush1.bf16.msra.mxu0 %v2454
    %3209 = vmatprep.subr.bf16.mxu0 %v2465
    %3210 = vmatpush1.bf16.msra.mxu0 %v2464
    %3211 = vmatprep.subr.bf16.mxu0 %v2475
    %3212 = vmatpush1.bf16.msra.mxu0 %v2474
    %3213 = vmatprep.subr.bf16.mxu0 %v2485
    %3214 = vmatpush1.bf16.msra.mxu0 %v2484
    %3215 = vmatprep.subr.bf16.mxu0 %v2495
    %3216 = vmatpush1.bf16.msra.mxu0 %v2494
    %3217 = vmatprep.mubr.bf16.mxu0 %v841
    %3218 = vmatmul.mubr.bf16.gmra.mrb[0].mxu0 %v840
    %v3219 = vpop.f32.mrb[0].mxu0
    %v3220 = vadd.f32 %v3179, %v3219
    %v3221 = vpop.f32.mrb[0].mxu0
    %v3222 = vadd.f32 %v3181, %v3221
    %v3223 = vpop.f32.mrb[0].mxu0
    %v3224 = vpop.f32.mrb[0].mxu0
    %3225 = vdwg.mxu0
    %v3226 = vtanh.pop %v2892
    %v3227 = vtanh.pop %v2894
    %v3228 = vtanh.pop %v2974
    %v3229 = vtanh.pop %v2976
    %v3230 = vtanh.pop %v3056
    %v3231 = vtanh.pop %v3058
    %v3232 = vtanh.pop %v3138
    %v3233 = vtanh.pop %v3140
    %v3234 = vtanh.pop %v3220
    %v3235 = vtanh.pop %v3222
    %3236 = vst [vmem:[#allocation16] sm:$0xff] %v3226
    %3237 = vst [vmem:[#allocation16 + $0x8] sm:$0xff] %v3227
    %3238 = vst [vmem:[#allocation16 + $0x10] sm:$0xff] %v3228
    %3239 = vst [vmem:[#allocation16 + $0x18] sm:$0xff] %v3229
    %3240 = vst [vmem:[#allocation16 + $0x20] sm:$0xff] %v3230
    %3241 = vst [vmem:[#allocation16 + $0x28] sm:$0xff] %v3231
    %3242 = vst [vmem:[#allocation16 + $0x30] sm:$0xff] %v3232
    %3243 = vst [vmem:[#allocation16 + $0x38] sm:$0xff] %v3233
    %3244 = vst [vmem:[#allocation16 + $0x40] sm:$0xff] %v3234
    %3245 = vst [vmem:[#allocation16 + $0x48] sm:$0xff] %v3235
    // Predicated region
    $region70: #{tpu_custom_call.1} parent=1 // pred_check
      _
    $region71: #{tpu_custom_call.1} parent=1 // pred_check_branch
      %3247 = sbr.rel (0) target = $region73
    $region72: #{tpu_custom_call.1} parent=1 // pred_region
      %s3249 = ssub.s32 1280, 1280
      %3250 = vsyncadd [#allocation4], %s3249
      %s3252 = sshll.u32 [#allocation16], 4
      %s3253 = int_to_ptr.vmem [resolvable:$true] %s3252
      %3255 = dma.vmem_to_hbm [thread:$0]  %s3253, 1280, %s9, [#allocation4]
    $region73: #{tpu_custom_call.1} parent=1 // pred_fallthru
      _
    // Predicated region
    $region74: #{tpu_custom_call.1} parent=1 // pred_check
      _
    $region75: #{tpu_custom_call.1} parent=1 // pred_check_branch
      %3257 = sbr.rel (0) target = $region77
    $region76: #{tpu_custom_call.1} parent=1 // pred_region
      %3258 = dma.done [#allocation4], 1280
    $region77: #{tpu_custom_call.1} parent=1 // pred_fallthru
      _
    %3259 = vsyncpa [#allocation3], 1
    %3260 = vsyncpa [#allocation6], 1
    %3261 = vsyncpa [#allocation9], 1
    %3262 = vsyncpa [#allocation12], 1
    %3263 = vsyncpa [#allocation15], 1
    %3264 = vsyncpa [#allocation4], 1

</llo_original>
